<compile_context>
chip_gen: v7x
topology: tpu7x:2x2x1
jax: 0.10.0
libtpu: 0.0.40
codegen_flags: <defaults>
</compile_context>

<pallas_src>
import math
from functools import partial

import jax
import jax.numpy as jnp
from jax.experimental import pallas as pl
from jax.experimental.pallas import tpu as pltpu


# ----------------------------- fused kernel -----------------------------------
def _fused_kernel(patches_ref, xo_ref, t_ref, w1_ref, b1_ref, gam_ref, bet_ref,
                  wt_ref, bt_ref, w2_ref, b2_ref, o_ref, *, B, HW, Cmid, T, E):
    N = B * HW

    # ---- 3x3 conv == ONE MXU matmul over the im2col patch matrix (bf16 in,
    #      f32 accumulate); bias folded in -------------------------------------
    y1 = jnp.dot(patches_ref[...], w1_ref[...],
                 preferred_element_type=jnp.float32) + b1_ref[...]      # (N, Cmid)

    # ---- BatchNorm2d batch statistics (training mode, biased variance) -------
    inv_n = 1.0 / float(N)
    mu = jnp.sum(y1, axis=0, keepdims=True) * inv_n                     # (1, Cmid)
    var = jnp.sum(jnp.square(y1 - mu), axis=0, keepdims=True) * inv_n   # (1, Cmid)
    inv_std = jax.lax.rsqrt(var + 1e-5)
    bns = gam_ref[...] * inv_std                                        # (1, Cmid)
    bnb = bet_ref[...] - mu * bns                                       # (1, Cmid)

    # ---- time MLP: SiLU -> Linear, whole batch in one tiny matmul ------------
    tv = t_ref[...]
    tv = tv * jax.nn.sigmoid(tv)
    temb = jnp.dot(tv, wt_ref[...],
                   preferred_element_type=jnp.float32) + bt_ref[...]    # (B, 2*Cmid)
    scale1 = temb[:, :Cmid] + 1.0                                       # (B, Cmid)
    shift = temb[:, Cmid:2 * Cmid]                                      # (B, Cmid)

    # fold BN + FiLM into one per-(batch, channel) affine
    a_bc = bns * scale1                                                 # (B, Cmid)
    c_bc = bnb * scale1 + shift                                         # (B, Cmid)

    inv_sqrt2 = 1.0 / math.sqrt(2.0)

    # ---- per-batch (sublane-aligned 64-row) chunks: FiLM -> GELU -> 1x1 conv
    #      -> per-task softmax -> fuse -> residual -> one wide store -----------
    for b in range(B):
        yb = y1[b * HW:(b + 1) * HW, :]                                 # (HW, Cmid)
        yf = yb * a_bc[b:b + 1, :] + c_bc[b:b + 1, :]                   # BN+FiLM affine
        act = 0.5 * yf * (1.0 + jax.lax.erf(yf * inv_sqrt2))            # exact GELU

        # 1x1 conv -> task-mix logits; columns pre-permuted to j*T + i
        logits = jnp.dot(act, w2_ref[...],
                         preferred_element_type=jnp.float32) + b2_ref[...]  # (HW, T*T)

        xo_b = xo_ref[b * HW:(b + 1) * HW, :]                           # (HW, T*E)

        blocks = []
        for j in range(T):
            if T == 2:
                # softmax over 2 logits == sigmoid of their difference:
                # no axis=-1 reduction, no reciprocal, single EUP sigmoid.
                p0 = jax.nn.sigmoid(logits[:, j * T:j * T + 1]
                                    - logits[:, j * T + 1:j * T + 2])   # (HW, 1)
                wgt = [p0, 1.0 - p0]
            else:
                # general case: explicit column slices (VPU), exact 1/sum
                cols = [logits[:, j * T + i:j * T + i + 1] for i in range(T)]
                m = cols[0]
                for c in cols[1:]:
                    m = jnp.maximum(m, c)
                ex = [jnp.exp(c - m) for c in cols]
                s = ex[0]
                for e_ in ex[1:]:
                    s = s + e_
                inv = 1.0 / s
                wgt = [e_ * inv for e_ in ex]

            fused = wgt[0] * xo_b[:, 0:E]
            for i in range(1, T):
                fused = fused + wgt[i] * xo_b[:, i * E:(i + 1) * E]
            blocks.append(0.5 * (fused + xo_b[:, j * E:(j + 1) * E]))

        # single full-width (HW, T*E) store per batch (fewer masked vst)
        o_ref[b * HW:(b + 1) * HW, :] = jnp.concatenate(blocks, axis=-1)


# --------------------------------- wrapper -------------------------------------
def fuse_withtime_forward(x_nchw, t, params, *, num_task):
    B, Cin, H, W = x_nchw.shape
    T = num_task
    assert Cin % T == 0, "embed_dim*num_task must be divisible by num_task"
    E = Cin // T
    assert E % 4 == 0, "embed_dim must be divisible by 4"
    Cmid = E // 4
    time_dim = t.shape[1]
    HW = H * W
    N = B * HW

    # NHWC activations; residual slab (channel = i*E + e)
    x = jnp.transpose(x_nchw, (0, 2, 3, 1)).astype(jnp.float32)         # (B, H, W, Cin)
    xo = x.reshape(N, T * E)

    # im2col in the wrapper (XLA, input is tiny): (N, 9*Cin) patch matrix,
    # columns ordered (dy, dx, cin).  bf16 operands (f32 accumulation in-kernel).
    xpad = jnp.pad(x, ((0, 0), (1, 1), (1, 1), (0, 0)))                 # (B, H+2, W+2, Cin)
    patches = jnp.concatenate(
        [xpad[:, dy:dy + H, dx:dx + W, :] for dy in range(3) for dx in range(3)],
        axis=-1).reshape(N, 9 * Cin).astype(jnp.bfloat16)

    # conv1 weight (3,3,Cin,Cmid) flattened to (9*Cin, Cmid) in (dy, dx, cin) order
    w1r = params["conv1_w"].reshape(9 * Cin, Cmid).astype(jnp.bfloat16)
    b1 = params["conv1_b"].reshape(1, Cmid).astype(jnp.float32)
    gamma = params["bn_gamma"].reshape(1, Cmid).astype(jnp.float32)
    beta = params["bn_beta"].reshape(1, Cmid).astype(jnp.float32)
    wt = params["time_w"].astype(jnp.float32)                           # (time_dim, 2*Cmid)
    bt = params["time_b"].reshape(1, 2 * Cmid).astype(jnp.float32)
    # permute conv2 columns so each softmax group (over i) is lane-contiguous: j*T+i
    w2p = params["conv2_w"].reshape(Cmid, T, T).transpose(0, 2, 1) \
                           .reshape(Cmid, T * T).astype(jnp.float32)
    b2p = params["conv2_b"].reshape(T, T).transpose(1, 0) \
                           .reshape(1, T * T).astype(jnp.float32)
    t2 = t.astype(jnp.float32)

    out_flat = pl.pallas_call(
        partial(_fused_kernel, B=B, HW=HW, Cmid=Cmid, T=T, E=E),
        out_shape=jax.ShapeDtypeStruct((N, T * E), jnp.float32),
        grid_spec=pltpu.PrefetchScalarGridSpec(
            num_scalar_prefetch=0,
            grid=(1,),
            in_specs=[
                pl.BlockSpec((N, 9 * Cin), lambda i: (0, 0)),
                pl.BlockSpec((N, T * E), lambda i: (0, 0)),
                pl.BlockSpec((B, time_dim), lambda i: (0, 0)),
                pl.BlockSpec((9 * Cin, Cmid), lambda i: (0, 0)),
                pl.BlockSpec((1, Cmid), lambda i: (0, 0)),
                pl.BlockSpec((1, Cmid), lambda i: (0, 0)),
                pl.BlockSpec((1, Cmid), lambda i: (0, 0)),
                pl.BlockSpec((time_dim, 2 * Cmid), lambda i: (0, 0)),
                pl.BlockSpec((1, 2 * Cmid), lambda i: (0, 0)),
                pl.BlockSpec((Cmid, T * T), lambda i: (0, 0)),
                pl.BlockSpec((1, T * T), lambda i: (0, 0)),
            ],
            out_specs=pl.BlockSpec((N, T * E), lambda i: (0, 0)),
        ),
        compiler_params=pltpu.CompilerParams(dimension_semantics=("arbitrary",)),
    )(patches, xo, t2, w1r, b1, gamma, beta, wt, bt, w2p, b2p)

    # (B*H*W, T*E) -> (B, T, E, H, W)  (matches torch output layout)
    return out_flat.reshape(B, H, W, T, E).transpose(0, 3, 4, 1, 2)


# ------------------------------ pure-JAX reference -----------------------------
def _reference(x_nchw, t, params, *, num_task):
    B, Cin, H, W = x_nchw.shape
    T = num_task
    E = Cin // T
    Cmid = E // 4
    x = x_nchw.astype(jnp.float32)
    w1 = jnp.transpose(params["conv1_w"], (3, 2, 0, 1))                 # OIHW
    y = jax.lax.conv_general_dilated(
        x, w1, (1, 1), "SAME", dimension_numbers=("NCHW", "OIHW", "NCHW"))
    y = y + params["conv1_b"].reshape(1, Cmid, 1, 1)
    mu = jnp.mean(y, axis=(0, 2, 3), keepdims=True)
    var = jnp.mean(jnp.square(y - mu), axis=(0, 2, 3), keepdims=True)
    y = (y - mu) / jnp.sqrt(var + 1e-5)
    y = y * params["bn_gamma"].reshape(1, Cmid, 1, 1) + params["bn_beta"].reshape(1, Cmid, 1, 1)
    tv = t * jax.nn.sigmoid(t)
    temb = tv @ params["time_w"] + params["time_b"]
    scale = temb[:, :Cmid].reshape(B, Cmid, 1, 1)
    shift = temb[:, Cmid:].reshape(B, Cmid, 1, 1)
    y = y * (scale + 1.0) + shift
    y = 0.5 * y * (1.0 + jax.lax.erf(y / jnp.sqrt(2.0)))
    logits = jnp.einsum("bchw,co->bohw", y, params["conv2_w"])
    logits = logits + params["conv2_b"].reshape(1, T * T, 1, 1)
    p = jax.nn.softmax(logits.reshape(B, T, T, 1, H, W), axis=1)
    xo = x.reshape(B, T, 1, E, H, W)
    fused = jnp.sum(xo * p, axis=1)
    return (fused + x.reshape(B, T, E, H, W)) / 2.0


# ----------------------------------- main ---------------------------------------
if __name__ == "__main__":
    B, embed_dim, num_task, time_dim, H, W = 2, 32, 2, 16, 8, 8
    Cin = embed_dim * num_task            # 64
    Cmid = embed_dim // 4                 # 8
    TT = num_task * num_task              # 4

    key = jax.random.PRNGKey(0)
    ks = jax.random.split(key, 10)
    params = {
        "conv1_w": 0.1 * jax.random.normal(ks[0], (3, 3, Cin, Cmid), jnp.float32),
        "conv1_b": 0.1 * jax.random.normal(ks[1], (Cmid,), jnp.float32),
        "bn_gamma": jnp.ones((Cmid,), jnp.float32),
        "bn_beta": jnp.zeros((Cmid,), jnp.float32),
        "time_w": 0.1 * jax.random.normal(ks[2], (time_dim, embed_dim // 2), jnp.float32),
        "time_b": 0.1 * jax.random.normal(ks[3], (embed_dim // 2,), jnp.float32),
        "conv2_w": 0.1 * jax.random.normal(ks[4], (Cmid, TT), jnp.float32),
        "conv2_b": 0.1 * jax.random.normal(ks[5], (TT,), jnp.float32),
    }

    x = jax.random.normal(ks[6], (B, Cin, H, W), jnp.float32)
    t = jax.random.normal(ks[7], (B, time_dim), jnp.float32)

    out = fuse_withtime_forward(x, t, params, num_task=num_task)
    out = jax.block_until_ready(out)

    ref = jax.block_until_ready(_reference(x, t, params, num_task=num_task))
    assert out.shape == (B, num_task, embed_dim, H, W), out.shape
    max_err = float(jnp.max(jnp.abs(out - ref)))
    assert max_err < 1e-2, f"max abs error too large: {max_err}"

    print("KERNEL_OK")
</pallas_src>

<mosaic_0001>
module attributes {stable_mosaic.version = 11 : i64} {
  func.func @_fused_kernel(%arg0: i32, %arg1: memref<128x576xbf16, #tpu.memory_space<vmem>>, %arg2: memref<128x64xf32, #tpu.memory_space<vmem>>, %arg3: memref<2x16xf32, #tpu.memory_space<vmem>>, %arg4: memref<576x8xbf16, #tpu.memory_space<vmem>>, %arg5: memref<1x8xf32, #tpu.memory_space<vmem>>, %arg6: memref<1x8xf32, #tpu.memory_space<vmem>>, %arg7: memref<1x8xf32, #tpu.memory_space<vmem>>, %arg8: memref<16x16xf32, #tpu.memory_space<vmem>>, %arg9: memref<1x16xf32, #tpu.memory_space<vmem>>, %arg10: memref<8x4xf32, #tpu.memory_space<vmem>>, %arg11: memref<1x4xf32, #tpu.memory_space<vmem>>, %arg12: memref<128x64xf32, #tpu.memory_space<vmem>>) attributes {dimension_semantics = [#tpu.dimension_semantics<arbitrary>], iteration_bounds = array<i64: 1>, scalar_prefetch = 0 : i64, scratch_operands = 0 : i64, tpu.core_type = #tpu.core_type<tc>, window_params = [{pipeline_mode = #tpu.pipeline_mode<synchronous>, transform_indices = @transform_0, window_bounds = array<i64: 128, 576>}, {pipeline_mode = #tpu.pipeline_mode<synchronous>, transform_indices = @transform_1, window_bounds = array<i64: 128, 64>}, {pipeline_mode = #tpu.pipeline_mode<synchronous>, transform_indices = @transform_2, window_bounds = array<i64: 2, 16>}, {pipeline_mode = #tpu.pipeline_mode<synchronous>, transform_indices = @transform_3, window_bounds = array<i64: 576, 8>}, {pipeline_mode = #tpu.pipeline_mode<synchronous>, transform_indices = @transform_4, window_bounds = array<i64: 1, 8>}, {pipeline_mode = #tpu.pipeline_mode<synchronous>, transform_indices = @transform_5, window_bounds = array<i64: 1, 8>}, {pipeline_mode = #tpu.pipeline_mode<synchronous>, transform_indices = @transform_6, window_bounds = array<i64: 1, 8>}, {pipeline_mode = #tpu.pipeline_mode<synchronous>, transform_indices = @transform_7, window_bounds = array<i64: 16, 16>}, {pipeline_mode = #tpu.pipeline_mode<synchronous>, transform_indices = @transform_8, window_bounds = array<i64: 1, 16>}, {pipeline_mode = #tpu.pipeline_mode<synchronous>, transform_indices = @transform_9, window_bounds = array<i64: 8, 4>}, {pipeline_mode = #tpu.pipeline_mode<synchronous>, transform_indices = @transform_10, window_bounds = array<i64: 1, 4>}, {pipeline_mode = #tpu.pipeline_mode<synchronous>, transform_indices = @transform_11, window_bounds = array<i64: 128, 64>}]} {
    %c0 = arith.constant 0 : index
    %c0_0 = arith.constant 0 : index
    %0 = vector.load %arg1[%c0, %c0_0] : memref<128x576xbf16, #tpu.memory_space<vmem>>, vector<128x576xbf16>
    %c0_1 = arith.constant 0 : index
    %c0_2 = arith.constant 0 : index
    %1 = vector.load %arg4[%c0_1, %c0_2] : memref<576x8xbf16, #tpu.memory_space<vmem>>, vector<576x8xbf16>
    %cst = arith.constant dense<0.000000e+00> : vector<128x8xf32>
    %2 = tpu.matmul %0, %1, %cst {dimension_numbers = #tpu.dot_dimension_numbers<[1], [0], [0], [1], [0, 0, 1, 1], [], []>} : vector<128x576xbf16>, vector<576x8xbf16>, vector<128x8xf32> -> vector<128x8xf32>
    %c0_3 = arith.constant 0 : index
    %c0_4 = arith.constant 0 : index
    %3 = vector.load %arg5[%c0_3, %c0_4] : memref<1x8xf32, #tpu.memory_space<vmem>>, vector<1x8xf32>
    %4 = vector.broadcast %3 : vector<1x8xf32> to vector<128x8xf32>
    %5 = arith.addf %2, %4 : vector<128x8xf32>
    %cst_5 = arith.constant dense<0.000000e+00> : vector<8xf32>
    %6 = vector.multi_reduction <add>, %5, %cst_5 [0] : vector<128x8xf32> to vector<8xf32>
    %7 = vector.shape_cast %6 : vector<8xf32> to vector<1x8xf32>
    %cst_6 = arith.constant 7.812500e-03 : f32
    %8 = vector.broadcast %cst_6 : f32 to vector<1x8xf32>
    %9 = arith.mulf %7, %8 : vector<1x8xf32>
    %10 = vector.broadcast %9 : vector<1x8xf32> to vector<128x8xf32>
    %11 = arith.subf %5, %10 : vector<128x8xf32>
    %12 = arith.mulf %11, %11 : vector<128x8xf32>
    %cst_7 = arith.constant dense<0.000000e+00> : vector<8xf32>
    %13 = vector.multi_reduction <add>, %12, %cst_7 [0] : vector<128x8xf32> to vector<8xf32>
    %14 = vector.shape_cast %13 : vector<8xf32> to vector<1x8xf32>
    %cst_8 = arith.constant 7.812500e-03 : f32
    %15 = vector.broadcast %cst_8 : f32 to vector<1x8xf32>
    %16 = arith.mulf %14, %15 : vector<1x8xf32>
    %cst_9 = arith.constant 9.99999974E-6 : f32
    %17 = vector.broadcast %cst_9 : f32 to vector<1x8xf32>
    %18 = arith.addf %16, %17 : vector<1x8xf32>
    %19 = math.rsqrt %18 : vector<1x8xf32>
    %c0_10 = arith.constant 0 : index
    %c0_11 = arith.constant 0 : index
    %20 = vector.load %arg6[%c0_10, %c0_11] : memref<1x8xf32, #tpu.memory_space<vmem>>, vector<1x8xf32>
    %21 = arith.mulf %20, %19 : vector<1x8xf32>
    %c0_12 = arith.constant 0 : index
    %c0_13 = arith.constant 0 : index
    %22 = vector.load %arg7[%c0_12, %c0_13] : memref<1x8xf32, #tpu.memory_space<vmem>>, vector<1x8xf32>
    %23 = arith.mulf %9, %21 : vector<1x8xf32>
    %24 = arith.subf %22, %23 : vector<1x8xf32>
    %c0_14 = arith.constant 0 : index
    %c0_15 = arith.constant 0 : index
    %25 = vector.load %arg3[%c0_14, %c0_15] : memref<2x16xf32, #tpu.memory_space<vmem>>, vector<2x16xf32>
    %26 = arith.negf %25 : vector<2x16xf32>
    %27 = math.exp %26 : vector<2x16xf32>
    %cst_16 = arith.constant 1.000000e+00 : f32
    %28 = vector.broadcast %cst_16 : f32 to vector<2x16xf32>
    %29 = arith.addf %28, %27 : vector<2x16xf32>
    %30 = arith.divf %28, %29 : vector<2x16xf32>
    %31 = arith.mulf %25, %30 : vector<2x16xf32>
    %c0_17 = arith.constant 0 : index
    %c0_18 = arith.constant 0 : index
    %32 = vector.load %arg8[%c0_17, %c0_18] : memref<16x16xf32, #tpu.memory_space<vmem>>, vector<16x16xf32>
    %cst_19 = arith.constant dense<0.000000e+00> : vector<2x16xf32>
    %33 = tpu.matmul %31, %32, %cst_19 {dimension_numbers = #tpu.dot_dimension_numbers<[1], [0], [0], [1], [0, 0, 1, 1], [], []>} : vector<2x16xf32>, vector<16x16xf32>, vector<2x16xf32> -> vector<2x16xf32>
    %c0_20 = arith.constant 0 : index
    %c0_21 = arith.constant 0 : index
    %34 = vector.load %arg9[%c0_20, %c0_21] : memref<1x16xf32, #tpu.memory_space<vmem>>, vector<1x16xf32>
    %35 = vector.broadcast %34 : vector<1x16xf32> to vector<2x16xf32>
    %36 = arith.addf %33, %35 : vector<2x16xf32>
    %37 = vector.extract_strided_slice %36 {offsets = [0, 0], sizes = [2, 8], strides = [1, 1]} : vector<2x16xf32> to vector<2x8xf32>
    %cst_22 = arith.constant 1.000000e+00 : f32
    %38 = vector.broadcast %cst_22 : f32 to vector<2x8xf32>
    %39 = arith.addf %37, %38 : vector<2x8xf32>
    %40 = vector.extract_strided_slice %36 {offsets = [0, 8], sizes = [2, 8], strides = [1, 1]} : vector<2x16xf32> to vector<2x8xf32>
    %41 = vector.broadcast %21 : vector<1x8xf32> to vector<2x8xf32>
    %42 = arith.mulf %41, %39 : vector<2x8xf32>
    %43 = vector.broadcast %24 : vector<1x8xf32> to vector<2x8xf32>
    %44 = arith.mulf %43, %39 : vector<2x8xf32>
    %45 = arith.addf %44, %40 : vector<2x8xf32>
    %46 = vector.extract_strided_slice %5 {offsets = [0, 0], sizes = [64, 8], strides = [1, 1]} : vector<128x8xf32> to vector<64x8xf32>
    %47 = vector.extract_strided_slice %42 {offsets = [0, 0], sizes = [1, 8], strides = [1, 1]} : vector<2x8xf32> to vector<1x8xf32>
    %48 = vector.broadcast %47 : vector<1x8xf32> to vector<64x8xf32>
    %49 = arith.mulf %46, %48 : vector<64x8xf32>
    %50 = vector.extract_strided_slice %45 {offsets = [0, 0], sizes = [1, 8], strides = [1, 1]} : vector<2x8xf32> to vector<1x8xf32>
    %51 = vector.broadcast %50 : vector<1x8xf32> to vector<64x8xf32>
    %52 = arith.addf %49, %51 : vector<64x8xf32>
    %cst_23 = arith.constant 5.000000e-01 : f32
    %53 = vector.broadcast %cst_23 : f32 to vector<64x8xf32>
    %54 = arith.mulf %53, %52 : vector<64x8xf32>
    %cst_24 = arith.constant 0.707106769 : f32
    %55 = vector.broadcast %cst_24 : f32 to vector<64x8xf32>
    %56 = arith.mulf %52, %55 : vector<64x8xf32>
    %57 = math.erf %56 : vector<64x8xf32>
    %cst_25 = arith.constant 1.000000e+00 : f32
    %58 = vector.broadcast %cst_25 : f32 to vector<64x8xf32>
    %59 = arith.addf %58, %57 : vector<64x8xf32>
    %60 = arith.mulf %54, %59 : vector<64x8xf32>
    %c0_26 = arith.constant 0 : index
    %c0_27 = arith.constant 0 : index
    %61 = vector.load %arg10[%c0_26, %c0_27] : memref<8x4xf32, #tpu.memory_space<vmem>>, vector<8x4xf32>
    %cst_28 = arith.constant dense<0.000000e+00> : vector<64x4xf32>
    %62 = tpu.matmul %60, %61, %cst_28 {dimension_numbers = #tpu.dot_dimension_numbers<[1], [0], [0], [1], [0, 0, 1, 1], [], []>} : vector<64x8xf32>, vector<8x4xf32>, vector<64x4xf32> -> vector<64x4xf32>
    %c0_29 = arith.constant 0 : index
    %c0_30 = arith.constant 0 : index
    %63 = vector.load %arg11[%c0_29, %c0_30] : memref<1x4xf32, #tpu.memory_space<vmem>>, vector<1x4xf32>
    %64 = vector.broadcast %63 : vector<1x4xf32> to vector<64x4xf32>
    %65 = arith.addf %62, %64 : vector<64x4xf32>
    %c0_31 = arith.constant 0 : index
    %c0_32 = arith.constant 0 : index
    %66 = vector.load %arg2[%c0_31, %c0_32] : memref<128x64xf32, #tpu.memory_space<vmem>>, vector<64x64xf32>
    %67 = vector.extract_strided_slice %65 {offsets = [0, 0], sizes = [64, 1], strides = [1, 1]} : vector<64x4xf32> to vector<64x1xf32>
    %68 = vector.extract_strided_slice %65 {offsets = [0, 1], sizes = [64, 1], strides = [1, 1]} : vector<64x4xf32> to vector<64x1xf32>
    %69 = arith.subf %67, %68 : vector<64x1xf32>
    %70 = arith.negf %69 : vector<64x1xf32>
    %71 = math.exp %70 : vector<64x1xf32>
    %cst_33 = arith.constant 1.000000e+00 : f32
    %72 = vector.broadcast %cst_33 : f32 to vector<64x1xf32>
    %73 = arith.addf %72, %71 : vector<64x1xf32>
    %74 = arith.divf %72, %73 : vector<64x1xf32>
    %cst_34 = arith.constant 1.000000e+00 : f32
    %75 = vector.broadcast %cst_34 : f32 to vector<64x1xf32>
    %76 = arith.subf %75, %74 : vector<64x1xf32>
    %77 = vector.extract_strided_slice %66 {offsets = [0, 0], sizes = [64, 32], strides = [1, 1]} : vector<64x64xf32> to vector<64x32xf32>
    %78 = vector.broadcast %74 : vector<64x1xf32> to vector<64x32xf32>
    %79 = arith.mulf %78, %77 : vector<64x32xf32>
    %80 = vector.extract_strided_slice %66 {offsets = [0, 32], sizes = [64, 32], strides = [1, 1]} : vector<64x64xf32> to vector<64x32xf32>
    %81 = vector.broadcast %76 : vector<64x1xf32> to vector<64x32xf32>
    %82 = arith.mulf %81, %80 : vector<64x32xf32>
    %83 = arith.addf %79, %82 : vector<64x32xf32>
    %84 = vector.extract_strided_slice %66 {offsets = [0, 0], sizes = [64, 32], strides = [1, 1]} : vector<64x64xf32> to vector<64x32xf32>
    %85 = arith.addf %83, %84 : vector<64x32xf32>
    %cst_35 = arith.constant 5.000000e-01 : f32
    %86 = vector.broadcast %cst_35 : f32 to vector<64x32xf32>
    %87 = arith.mulf %86, %85 : vector<64x32xf32>
    %88 = vector.extract_strided_slice %65 {offsets = [0, 2], sizes = [64, 1], strides = [1, 1]} : vector<64x4xf32> to vector<64x1xf32>
    %89 = vector.extract_strided_slice %65 {offsets = [0, 3], sizes = [64, 1], strides = [1, 1]} : vector<64x4xf32> to vector<64x1xf32>
    %90 = arith.subf %88, %89 : vector<64x1xf32>
    %91 = arith.negf %90 : vector<64x1xf32>
    %92 = math.exp %91 : vector<64x1xf32>
    %cst_36 = arith.constant 1.000000e+00 : f32
    %93 = vector.broadcast %cst_36 : f32 to vector<64x1xf32>
    %94 = arith.addf %93, %92 : vector<64x1xf32>
    %95 = arith.divf %93, %94 : vector<64x1xf32>
    %cst_37 = arith.constant 1.000000e+00 : f32
    %96 = vector.broadcast %cst_37 : f32 to vector<64x1xf32>
    %97 = arith.subf %96, %95 : vector<64x1xf32>
    %98 = vector.extract_strided_slice %66 {offsets = [0, 0], sizes = [64, 32], strides = [1, 1]} : vector<64x64xf32> to vector<64x32xf32>
    %99 = vector.broadcast %95 : vector<64x1xf32> to vector<64x32xf32>
    %100 = arith.mulf %99, %98 : vector<64x32xf32>
    %101 = vector.extract_strided_slice %66 {offsets = [0, 32], sizes = [64, 32], strides = [1, 1]} : vector<64x64xf32> to vector<64x32xf32>
    %102 = vector.broadcast %97 : vector<64x1xf32> to vector<64x32xf32>
    %103 = arith.mulf %102, %101 : vector<64x32xf32>
    %104 = arith.addf %100, %103 : vector<64x32xf32>
    %105 = vector.extract_strided_slice %66 {offsets = [0, 32], sizes = [64, 32], strides = [1, 1]} : vector<64x64xf32> to vector<64x32xf32>
    %106 = arith.addf %104, %105 : vector<64x32xf32>
    %cst_38 = arith.constant 5.000000e-01 : f32
    %107 = vector.broadcast %cst_38 : f32 to vector<64x32xf32>
    %108 = arith.mulf %107, %106 : vector<64x32xf32>
    %109 = tpu.concatenate %87, %108 in 1 : vector<64x32xf32>, vector<64x32xf32> -> vector<64x64xf32>
    %c0_39 = arith.constant 0 : index
    %c0_40 = arith.constant 0 : index
    %110 = vector.load %arg12[%c0_39, %c0_40] : memref<128x64xf32, #tpu.memory_space<vmem>>, vector<64x64xf32>
    tpu.vector_store %arg12[%c0_39, %c0_40], %109 {strides = array<i32>} : memref<128x64xf32, #tpu.memory_space<vmem>>, vector<64x64xf32>,
    %111 = vector.extract_strided_slice %5 {offsets = [64, 0], sizes = [64, 8], strides = [1, 1]} : vector<128x8xf32> to vector<64x8xf32>
    %112 = vector.extract_strided_slice %42 {offsets = [1, 0], sizes = [1, 8], strides = [1, 1]} : vector<2x8xf32> to vector<1x8xf32>
    %113 = vector.broadcast %112 : vector<1x8xf32> to vector<64x8xf32>
    %114 = arith.mulf %111, %113 : vector<64x8xf32>
    %115 = vector.extract_strided_slice %45 {offsets = [1, 0], sizes = [1, 8], strides = [1, 1]} : vector<2x8xf32> to vector<1x8xf32>
    %116 = vector.broadcast %115 : vector<1x8xf32> to vector<64x8xf32>
    %117 = arith.addf %114, %116 : vector<64x8xf32>
    %cst_41 = arith.constant 5.000000e-01 : f32
    %118 = vector.broadcast %cst_41 : f32 to vector<64x8xf32>
    %119 = arith.mulf %118, %117 : vector<64x8xf32>
    %cst_42 = arith.constant 0.707106769 : f32
    %120 = vector.broadcast %cst_42 : f32 to vector<64x8xf32>
    %121 = arith.mulf %117, %120 : vector<64x8xf32>
    %122 = math.erf %121 : vector<64x8xf32>
    %cst_43 = arith.constant 1.000000e+00 : f32
    %123 = vector.broadcast %cst_43 : f32 to vector<64x8xf32>
    %124 = arith.addf %123, %122 : vector<64x8xf32>
    %125 = arith.mulf %119, %124 : vector<64x8xf32>
    %c0_44 = arith.constant 0 : index
    %c0_45 = arith.constant 0 : index
    %126 = vector.load %arg10[%c0_44, %c0_45] : memref<8x4xf32, #tpu.memory_space<vmem>>, vector<8x4xf32>
    %cst_46 = arith.constant dense<0.000000e+00> : vector<64x4xf32>
    %127 = tpu.matmul %125, %126, %cst_46 {dimension_numbers = #tpu.dot_dimension_numbers<[1], [0], [0], [1], [0, 0, 1, 1], [], []>} : vector<64x8xf32>, vector<8x4xf32>, vector<64x4xf32> -> vector<64x4xf32>
    %c0_47 = arith.constant 0 : index
    %c0_48 = arith.constant 0 : index
    %128 = vector.load %arg11[%c0_47, %c0_48] : memref<1x4xf32, #tpu.memory_space<vmem>>, vector<1x4xf32>
    %129 = vector.broadcast %128 : vector<1x4xf32> to vector<64x4xf32>
    %130 = arith.addf %127, %129 : vector<64x4xf32>
    %c64 = arith.constant 64 : index
    %c0_49 = arith.constant 0 : index
    %131 = vector.load %arg2[%c64, %c0_49] : memref<128x64xf32, #tpu.memory_space<vmem>>, vector<64x64xf32>
    %132 = vector.extract_strided_slice %130 {offsets = [0, 0], sizes = [64, 1], strides = [1, 1]} : vector<64x4xf32> to vector<64x1xf32>
    %133 = vector.extract_strided_slice %130 {offsets = [0, 1], sizes = [64, 1], strides = [1, 1]} : vector<64x4xf32> to vector<64x1xf32>
    %134 = arith.subf %132, %133 : vector<64x1xf32>
    %135 = arith.negf %134 : vector<64x1xf32>
    %136 = math.exp %135 : vector<64x1xf32>
    %cst_50 = arith.constant 1.000000e+00 : f32
    %137 = vector.broadcast %cst_50 : f32 to vector<64x1xf32>
    %138 = arith.addf %137, %136 : vector<64x1xf32>
    %139 = arith.divf %137, %138 : vector<64x1xf32>
    %cst_51 = arith.constant 1.000000e+00 : f32
    %140 = vector.broadcast %cst_51 : f32 to vector<64x1xf32>
    %141 = arith.subf %140, %139 : vector<64x1xf32>
    %142 = vector.extract_strided_slice %131 {offsets = [0, 0], sizes = [64, 32], strides = [1, 1]} : vector<64x64xf32> to vector<64x32xf32>
    %143 = vector.broadcast %139 : vector<64x1xf32> to vector<64x32xf32>
    %144 = arith.mulf %143, %142 : vector<64x32xf32>
    %145 = vector.extract_strided_slice %131 {offsets = [0, 32], sizes = [64, 32], strides = [1, 1]} : vector<64x64xf32> to vector<64x32xf32>
    %146 = vector.broadcast %141 : vector<64x1xf32> to vector<64x32xf32>
    %147 = arith.mulf %146, %145 : vector<64x32xf32>
    %148 = arith.addf %144, %147 : vector<64x32xf32>
    %149 = vector.extract_strided_slice %131 {offsets = [0, 0], sizes = [64, 32], strides = [1, 1]} : vector<64x64xf32> to vector<64x32xf32>
    %150 = arith.addf %148, %149 : vector<64x32xf32>
    %cst_52 = arith.constant 5.000000e-01 : f32
    %151 = vector.broadcast %cst_52 : f32 to vector<64x32xf32>
    %152 = arith.mulf %151, %150 : vector<64x32xf32>
    %153 = vector.extract_strided_slice %130 {offsets = [0, 2], sizes = [64, 1], strides = [1, 1]} : vector<64x4xf32> to vector<64x1xf32>
    %154 = vector.extract_strided_slice %130 {offsets = [0, 3], sizes = [64, 1], strides = [1, 1]} : vector<64x4xf32> to vector<64x1xf32>
    %155 = arith.subf %153, %154 : vector<64x1xf32>
    %156 = arith.negf %155 : vector<64x1xf32>
    %157 = math.exp %156 : vector<64x1xf32>
    %cst_53 = arith.constant 1.000000e+00 : f32
    %158 = vector.broadcast %cst_53 : f32 to vector<64x1xf32>
    %159 = arith.addf %158, %157 : vector<64x1xf32>
    %160 = arith.divf %158, %159 : vector<64x1xf32>
    %cst_54 = arith.constant 1.000000e+00 : f32
    %161 = vector.broadcast %cst_54 : f32 to vector<64x1xf32>
    %162 = arith.subf %161, %160 : vector<64x1xf32>
    %163 = vector.extract_strided_slice %131 {offsets = [0, 0], sizes = [64, 32], strides = [1, 1]} : vector<64x64xf32> to vector<64x32xf32>
    %164 = vector.broadcast %160 : vector<64x1xf32> to vector<64x32xf32>
    %165 = arith.mulf %164, %163 : vector<64x32xf32>
    %166 = vector.extract_strided_slice %131 {offsets = [0, 32], sizes = [64, 32], strides = [1, 1]} : vector<64x64xf32> to vector<64x32xf32>
    %167 = vector.broadcast %162 : vector<64x1xf32> to vector<64x32xf32>
    %168 = arith.mulf %167, %166 : vector<64x32xf32>
    %169 = arith.addf %165, %168 : vector<64x32xf32>
    %170 = vector.extract_strided_slice %131 {offsets = [0, 32], sizes = [64, 32], strides = [1, 1]} : vector<64x64xf32> to vector<64x32xf32>
    %171 = arith.addf %169, %170 : vector<64x32xf32>
    %cst_55 = arith.constant 5.000000e-01 : f32
    %172 = vector.broadcast %cst_55 : f32 to vector<64x32xf32>
    %173 = arith.mulf %172, %171 : vector<64x32xf32>
    %174 = tpu.concatenate %152, %173 in 1 : vector<64x32xf32>, vector<64x32xf32> -> vector<64x64xf32>
    %c64_56 = arith.constant 64 : index
    %c0_57 = arith.constant 0 : index
    %175 = vector.load %arg12[%c64_56, %c0_57] : memref<128x64xf32, #tpu.memory_space<vmem>>, vector<64x64xf32>
    tpu.vector_store %arg12[%c64_56, %c0_57], %174 {strides = array<i32>} : memref<128x64xf32, #tpu.memory_space<vmem>>, vector<64x64xf32>,
    return
  }
  func.func @transform_0(%arg0: i32) -> (i32, i32) {
    %c0_i32 = arith.constant 0 : i32
    %c0_i32_0 = arith.constant 0 : i32
    %c0_i32_1 = arith.constant 0 : i32
    return %c0_i32, %c0_i32_0 : i32, i32
  }
  func.func @transform_1(%arg0: i32) -> (i32, i32) {
    %c0_i32 = arith.constant 0 : i32
    %c0_i32_0 = arith.constant 0 : i32
    %c0_i32_1 = arith.constant 0 : i32
    return %c0_i32, %c0_i32_0 : i32, i32
  }
  func.func @transform_2(%arg0: i32) -> (i32, i32) {
    %c0_i32 = arith.constant 0 : i32
    %c0_i32_0 = arith.constant 0 : i32
    %c0_i32_1 = arith.constant 0 : i32
    return %c0_i32, %c0_i32_0 : i32, i32
  }
  func.func @transform_3(%arg0: i32) -> (i32, i32) {
    %c0_i32 = arith.constant 0 : i32
    %c0_i32_0 = arith.constant 0 : i32
    %c0_i32_1 = arith.constant 0 : i32
    return %c0_i32, %c0_i32_0 : i32, i32
  }
  func.func @transform_4(%arg0: i32) -> (i32, i32) {
    %c0_i32 = arith.constant 0 : i32
    %c0_i32_0 = arith.constant 0 : i32
    %c0_i32_1 = arith.constant 0 : i32
    return %c0_i32, %c0_i32_0 : i32, i32
  }
  func.func @transform_5(%arg0: i32) -> (i32, i32) {
    %c0_i32 = arith.constant 0 : i32
    %c0_i32_0 = arith.constant 0 : i32
    %c0_i32_1 = arith.constant 0 : i32
    return %c0_i32, %c0_i32_0 : i32, i32
  }
  func.func @transform_6(%arg0: i32) -> (i32, i32) {
    %c0_i32 = arith.constant 0 : i32
    %c0_i32_0 = arith.constant 0 : i32
    %c0_i32_1 = arith.constant 0 : i32
    return %c0_i32, %c0_i32_0 : i32, i32
  }
  func.func @transform_7(%arg0: i32) -> (i32, i32) {
    %c0_i32 = arith.constant 0 : i32
    %c0_i32_0 = arith.constant 0 : i32
    %c0_i32_1 = arith.constant 0 : i32
    return %c0_i32, %c0_i32_0 : i32, i32
  }
  func.func @transform_8(%arg0: i32) -> (i32, i32) {
    %c0_i32 = arith.constant 0 : i32
    %c0_i32_0 = arith.constant 0 : i32
    %c0_i32_1 = arith.constant 0 : i32
    return %c0_i32, %c0_i32_0 : i32, i32
  }
  func.func @transform_9(%arg0: i32) -> (i32, i32) {
    %c0_i32 = arith.constant 0 : i32
    %c0_i32_0 = arith.constant 0 : i32
    %c0_i32_1 = arith.constant 0 : i32
    return %c0_i32, %c0_i32_0 : i32, i32
  }
  func.func @transform_10(%arg0: i32) -> (i32, i32) {
    %c0_i32 = arith.constant 0 : i32
    %c0_i32_0 = arith.constant 0 : i32
    %c0_i32_1 = arith.constant 0 : i32
    return %c0_i32, %c0_i32_0 : i32, i32
  }
  func.func @transform_11(%arg0: i32) -> (i32, i32) {
    %c0_i32 = arith.constant 0 : i32
    %c0_i32_0 = arith.constant 0 : i32
    %c0_i32_1 = arith.constant 0 : i32
    return %c0_i32, %c0_i32_0 : i32, i32
  }
}

</mosaic_0001>

<llo_original>
// kernel: tpu_custom_call.1
$region0: #{tpu_custom_call.1}
  #allocation0 [shape = 'u32[]', space=smem, size = 0x4, offset = 0x4, fixed_abs, tag = 'smem constant byte address 0x4 - core index']
  #allocation1 [shape = 'u32[144,128]{1,0:T(1,128)}', space=vmem, size = 0x12000, scoped, tag = 'internal scratch']
  %s0 = inlined_call_operand.vmem [shape: bf16[128,576], index: 0, kind: input, shape index: {}]
  %s1 = inlined_call_operand.vmem [shape: f32[128,64], index: 1, kind: input, shape index: {}]
  %s2 = inlined_call_operand.vmem [shape: f32[2,16], index: 2, kind: input, shape index: {}]
  %s3 = inlined_call_operand.vmem [shape: bf16[576,8], index: 3, kind: input, shape index: {}]
  %s4 = inlined_call_operand.vmem [shape: f32[1,8], index: 4, kind: input, shape index: {}]
  %s5 = inlined_call_operand.vmem [shape: f32[1,8], index: 5, kind: input, shape index: {}]
  %s6 = inlined_call_operand.vmem [shape: f32[1,8], index: 6, kind: input, shape index: {}]
  %s7 = inlined_call_operand.vmem [shape: f32[16,16], index: 7, kind: input, shape index: {}]
  %s8 = inlined_call_operand.vmem [shape: f32[1,16], index: 8, kind: input, shape index: {}]
  %s9 = inlined_call_operand.vmem [shape: f32[8,4], index: 9, kind: input, shape index: {}]
  %s10 = inlined_call_operand.vmem [shape: f32[1,4], index: 10, kind: input, shape index: {}]
  %s11 = inlined_call_operand.vmem [shape: f32[128,64], index: 11, kind: output, shape index: {}]
  %s12 = sld [smem:[#allocation0]]
  $region54: #{tpu_custom_call.1} parent=0
    _
  %s14 = ssub.s32 1, %s12
  %s15 = scalar_select 0, %s14, %s12
  // Predicated region
  $region2: #{tpu_custom_call.1} parent=0 // pred_check
    _
  $region3: #{tpu_custom_call.1} parent=0 // pred_check_branch
    %17 = sbr.rel (0) target = $region5
  $region4: #{tpu_custom_call.1} parent=0 // pred_region
    _
  $region5: #{tpu_custom_call.1} parent=0 // pred_fallthru
    _
  // Predicated region
  $region6: #{tpu_custom_call.1} parent=0 // pred_check
    _
  $region7: #{tpu_custom_call.1} parent=0 // pred_check_branch
    %19 = sbr.rel (0) target = $region9
  $region8: #{tpu_custom_call.1} parent=0 // pred_region
    _
  $region9: #{tpu_custom_call.1} parent=0 // pred_fallthru
    _
  // Predicated region
  $region10: #{tpu_custom_call.1} parent=0 // pred_check
    _
  $region11: #{tpu_custom_call.1} parent=0 // pred_check_branch
    %21 = sbr.rel (0) target = $region13
  $region12: #{tpu_custom_call.1} parent=0 // pred_region
    _
  $region13: #{tpu_custom_call.1} parent=0 // pred_fallthru
    _
  // Predicated region
  $region14: #{tpu_custom_call.1} parent=0 // pred_check
    _
  $region15: #{tpu_custom_call.1} parent=0 // pred_check_branch
    %23 = sbr.rel (0) target = $region17
  $region16: #{tpu_custom_call.1} parent=0 // pred_region
    _
  $region17: #{tpu_custom_call.1} parent=0 // pred_fallthru
    _
  // Predicated region
  $region18: #{tpu_custom_call.1} parent=0 // pred_check
    _
  $region19: #{tpu_custom_call.1} parent=0 // pred_check_branch
    %25 = sbr.rel (0) target = $region21
  $region20: #{tpu_custom_call.1} parent=0 // pred_region
    _
  $region21: #{tpu_custom_call.1} parent=0 // pred_fallthru
    _
  // Predicated region
  $region22: #{tpu_custom_call.1} parent=0 // pred_check
    _
  $region23: #{tpu_custom_call.1} parent=0 // pred_check_branch
    %27 = sbr.rel (0) target = $region25
  $region24: #{tpu_custom_call.1} parent=0 // pred_region
    _
  $region25: #{tpu_custom_call.1} parent=0 // pred_fallthru
    _
  // Predicated region
  $region26: #{tpu_custom_call.1} parent=0 // pred_check
    _
  $region27: #{tpu_custom_call.1} parent=0 // pred_check_branch
    %29 = sbr.rel (0) target = $region29
  $region28: #{tpu_custom_call.1} parent=0 // pred_region
    _
  $region29: #{tpu_custom_call.1} parent=0 // pred_fallthru
    _
  // Predicated region
  $region30: #{tpu_custom_call.1} parent=0 // pred_check
    _
  $region31: #{tpu_custom_call.1} parent=0 // pred_check_branch
    %31 = sbr.rel (0) target = $region33
  $region32: #{tpu_custom_call.1} parent=0 // pred_region
    _
  $region33: #{tpu_custom_call.1} parent=0 // pred_fallthru
    _
  // Predicated region
  $region34: #{tpu_custom_call.1} parent=0 // pred_check
    _
  $region35: #{tpu_custom_call.1} parent=0 // pred_check_branch
    %33 = sbr.rel (0) target = $region37
  $region36: #{tpu_custom_call.1} parent=0 // pred_region
    _
  $region37: #{tpu_custom_call.1} parent=0 // pred_fallthru
    _
  // Predicated region
  $region38: #{tpu_custom_call.1} parent=0 // pred_check
    _
  $region39: #{tpu_custom_call.1} parent=0 // pred_check_branch
    %35 = sbr.rel (0) target = $region41
  $region40: #{tpu_custom_call.1} parent=0 // pred_region
    _
  $region41: #{tpu_custom_call.1} parent=0 // pred_fallthru
    _
  // Predicated region
  $region42: #{tpu_custom_call.1} parent=0 // pred_check
    _
  $region43: #{tpu_custom_call.1} parent=0 // pred_check_branch
    %37 = sbr.rel (0) target = $region45
  $region44: #{tpu_custom_call.1} parent=0 // pred_region
    _
  $region45: #{tpu_custom_call.1} parent=0 // pred_fallthru
    _
  %v39 = vld [vmem:[%s0] sm:$0xff]
  %v40 = vld [vmem:[%s0 + $0x8] sm:$0xff]
  %v41 = vld [vmem:[%s0 + $0x10] sm:$0xf]
  %v42 = vld [vmem:[%s0 + $0x14] sm:$0xff]
  %v43 = vld [vmem:[%s0 + $0x1c] sm:$0xff]
  %v44 = vld [vmem:[%s0 + $0x24] sm:$0xf]
  %v45 = vld [vmem:[%s0 + $0x28] sm:$0xff]
  %v46 = vld [vmem:[%s0 + $0x30] sm:$0xff]
  %v47 = vld [vmem:[%s0 + $0x38] sm:$0xf]
  %v48 = vld [vmem:[%s0 + $0x3c] sm:$0xff]
  %v49 = vld [vmem:[%s0 + $0x44] sm:$0xff]
  %v50 = vld [vmem:[%s0 + $0x4c] sm:$0xf]
  %v51 = vld [vmem:[%s0 + $0x50] sm:$0xff]
  %v52 = vld [vmem:[%s0 + $0x58] sm:$0xff]
  %v53 = vld [vmem:[%s0 + $0x60] sm:$0xf]
  %v54 = vld [vmem:[%s0 + $0x64] sm:$0xff]
  %v55 = vld [vmem:[%s0 + $0x6c] sm:$0xff]
  %v56 = vld [vmem:[%s0 + $0x74] sm:$0xf]
  %v57 = vld [vmem:[%s0 + $0x78] sm:$0xff]
  %v58 = vld [vmem:[%s0 + $0x80] sm:$0xff]
  %v59 = vld [vmem:[%s0 + $0x88] sm:$0xf]
  %v60 = vld [vmem:[%s0 + $0x8c] sm:$0xff]
  %v61 = vld [vmem:[%s0 + $0x94] sm:$0xff]
  %v62 = vld [vmem:[%s0 + $0x9c] sm:$0xf]
  %v63 = vld [vmem:[%s0 + $0xa0] sm:$0xff]
  %v64 = vld [vmem:[%s0 + $0xa8] sm:$0xff]
  %v65 = vld [vmem:[%s0 + $0xb0] sm:$0xf]
  %v66 = vld [vmem:[%s0 + $0xb4] sm:$0xff]
  %v67 = vld [vmem:[%s0 + $0xbc] sm:$0xff]
  %v68 = vld [vmem:[%s0 + $0xc4] sm:$0xf]
  %v69 = vld [vmem:[%s0 + $0xc8] sm:$0xff]
  %v70 = vld [vmem:[%s0 + $0xd0] sm:$0xff]
  %v71 = vld [vmem:[%s0 + $0xd8] sm:$0xf]
  %v72 = vld [vmem:[%s0 + $0xdc] sm:$0xff]
  %v73 = vld [vmem:[%s0 + $0xe4] sm:$0xff]
  %v74 = vld [vmem:[%s0 + $0xec] sm:$0xf]
  %v75 = vld [vmem:[%s0 + $0xf0] sm:$0xff]
  %v76 = vld [vmem:[%s0 + $0xf8] sm:$0xff]
  %v77 = vld [vmem:[%s0 + $0x100] sm:$0xf]
  %v78 = vld [vmem:[%s0 + $0x104] sm:$0xff]
  %v79 = vld [vmem:[%s0 + $0x10c] sm:$0xff]
  %v80 = vld [vmem:[%s0 + $0x114] sm:$0xf]
  %v81 = vld [vmem:[%s0 + $0x118] sm:$0xff]
  %v82 = vld [vmem:[%s0 + $0x120] sm:$0xff]
  %v83 = vld [vmem:[%s0 + $0x128] sm:$0xf]
  %v84 = vld [vmem:[%s0 + $0x12c] sm:$0xff]
  %v85 = vld [vmem:[%s0 + $0x134] sm:$0xff]
  %v86 = vld [vmem:[%s0 + $0x13c] sm:$0xf]
  %v87 = vld [vmem:[%s3] sm:$0xf]
  %v88 = vld [vmem:[%s3 + $0x4] sm:$0xf]
  %v89 = vld [vmem:[%s3 + $0x8] sm:$0xf]
  %v90 = vld [vmem:[%s3 + $0xc] sm:$0xf]
  %v91 = vld [vmem:[%s3 + $0x10] sm:$0xf]
  %v92 = vld [vmem:[%s3 + $0x14] sm:$0xf]
  %v93 = vld [vmem:[%s3 + $0x18] sm:$0xf]
  %v94 = vld [vmem:[%s3 + $0x1c] sm:$0xf]
  %v95 = vld [vmem:[%s3 + $0x20] sm:$0xf]
  %v96 = vld [vmem:[%s3 + $0x24] sm:$0xf]
  %v97 = vld [vmem:[%s3 + $0x28] sm:$0xf]
  %v98 = vld [vmem:[%s3 + $0x2c] sm:$0xf]
  %v99 = vld [vmem:[%s3 + $0x30] sm:$0xf]
  %v100 = vld [vmem:[%s3 + $0x34] sm:$0xf]
  %v101 = vld [vmem:[%s3 + $0x38] sm:$0xf]
  %v102 = vld [vmem:[%s3 + $0x3c] sm:$0xf]
  %v103 = vld [vmem:[%s3 + $0x40] sm:$0xf]
  %v104 = vld [vmem:[%s3 + $0x44] sm:$0xf]
  %v105 = vld [vmem:[%s3 + $0x48] sm:$0xf]
  %v106 = vld [vmem:[%s3 + $0x4c] sm:$0xf]
  %v107 = vld [vmem:[%s3 + $0x50] sm:$0xf]
  %v108 = vld [vmem:[%s3 + $0x54] sm:$0xf]
  %v109 = vld [vmem:[%s3 + $0x58] sm:$0xf]
  %v110 = vld [vmem:[%s3 + $0x5c] sm:$0xf]
  %v111 = vld [vmem:[%s3 + $0x60] sm:$0xf]
  %v112 = vld [vmem:[%s3 + $0x64] sm:$0xf]
  %v113 = vld [vmem:[%s3 + $0x68] sm:$0xf]
  %v114 = vld [vmem:[%s3 + $0x6c] sm:$0xf]
  %v115 = vld [vmem:[%s3 + $0x70] sm:$0xf]
  %v116 = vld [vmem:[%s3 + $0x74] sm:$0xf]
  %v117 = vld [vmem:[%s3 + $0x78] sm:$0xf]
  %v118 = vld [vmem:[%s3 + $0x7c] sm:$0xf]
  %v119 = vld [vmem:[%s3 + $0x80] sm:$0xf]
  %v120 = vld [vmem:[%s3 + $0x84] sm:$0xf]
  %v121 = vld [vmem:[%s3 + $0x88] sm:$0xf]
  %v122 = vld [vmem:[%s3 + $0x8c] sm:$0xf]
  %v123 = vld [vmem:[%s3 + $0x90] sm:$0xf]
  %v124 = vld [vmem:[%s3 + $0x94] sm:$0xf]
  %v125 = vld [vmem:[%s3 + $0x98] sm:$0xf]
  %v126 = vld [vmem:[%s3 + $0x9c] sm:$0xf]
  %v127 = vld [vmem:[%s3 + $0xa0] sm:$0xf]
  %v128 = vld [vmem:[%s3 + $0xa4] sm:$0xf]
  %v129 = vld [vmem:[%s3 + $0xa8] sm:$0xf]
  %v130 = vld [vmem:[%s3 + $0xac] sm:$0xf]
  %v131 = vld [vmem:[%s3 + $0xb0] sm:$0xf]
  %v132 = vld [vmem:[%s3 + $0xb4] sm:$0xf]
  %v133 = vld [vmem:[%s3 + $0xb8] sm:$0xf]
  %v134 = vld [vmem:[%s3 + $0xbc] sm:$0xf]
  %v135 = vld [vmem:[%s3 + $0xc0] sm:$0xf]
  %v136 = vld [vmem:[%s3 + $0xc4] sm:$0xf]
  %v137 = vld [vmem:[%s3 + $0xc8] sm:$0xf]
  %v138 = vld [vmem:[%s3 + $0xcc] sm:$0xf]
  %v139 = vld [vmem:[%s3 + $0xd0] sm:$0xf]
  %v140 = vld [vmem:[%s3 + $0xd4] sm:$0xf]
  %v141 = vld [vmem:[%s3 + $0xd8] sm:$0xf]
  %v142 = vld [vmem:[%s3 + $0xdc] sm:$0xf]
  %v143 = vld [vmem:[%s3 + $0xe0] sm:$0xf]
  %v144 = vld [vmem:[%s3 + $0xe4] sm:$0xf]
  %v145 = vld [vmem:[%s3 + $0xe8] sm:$0xf]
  %v146 = vld [vmem:[%s3 + $0xec] sm:$0xf]
  %v147 = vld [vmem:[%s3 + $0xf0] sm:$0xf]
  %v148 = vld [vmem:[%s3 + $0xf4] sm:$0xf]
  %v149 = vld [vmem:[%s3 + $0xf8] sm:$0xf]
  %v150 = vld [vmem:[%s3 + $0xfc] sm:$0xf]
  %v151 = vld [vmem:[%s3 + $0x100] sm:$0xf]
  %v152 = vld [vmem:[%s3 + $0x104] sm:$0xf]
  %v153 = vld [vmem:[%s3 + $0x108] sm:$0xf]
  %v154 = vld [vmem:[%s3 + $0x10c] sm:$0xf]
  %v155 = vld [vmem:[%s3 + $0x110] sm:$0xf]
  %v156 = vld [vmem:[%s3 + $0x114] sm:$0xf]
  %v157 = vld [vmem:[%s3 + $0x118] sm:$0xf]
  %v158 = vld [vmem:[%s3 + $0x11c] sm:$0xf]
  %v159 = vld [vmem:[%s4] sm:$0x1]
  %v161 = vlaneseq
  %v162 = vshrl.u32 %v161, 7
  %v163 = vsub.s32 0, %v162
  %v164 = vrot.slane %v159, %v163
  %v214 = vunpack.c.l.b16 %v39
  %v215 = vunpack.c.h.b16 %v39
  %v216 = vunpack.c.l.b16 %v40
  %v217 = vunpack.c.h.b16 %v40
  %v218 = vunpack.c.l.b16 %v41
  %v219 = vunpack.c.l.b16 %v42
  %v220 = vunpack.c.h.b16 %v42
  %v221 = vunpack.c.l.b16 %v43
  %v222 = vunpack.c.h.b16 %v43
  %v223 = vunpack.c.l.b16 %v44
  %v224 = vunpack.c.l.b16 %v45
  %v225 = vunpack.c.h.b16 %v45
  %v226 = vunpack.c.l.b16 %v46
  %v227 = vunpack.c.h.b16 %v46
  %v228 = vunpack.c.l.b16 %v47
  %v229 = vunpack.c.l.b16 %v48
  %v230 = vunpack.c.h.b16 %v48
  %v231 = vunpack.c.l.b16 %v49
  %v232 = vunpack.c.h.b16 %v49
  %v233 = vunpack.c.l.b16 %v50
  %v234 = vunpack.c.l.b16 %v51
  %v235 = vunpack.c.h.b16 %v51
  %v236 = vunpack.c.l.b16 %v52
  %v237 = vunpack.c.h.b16 %v52
  %v238 = vunpack.c.l.b16 %v53
  %v239 = vunpack.c.l.b16 %v54
  %v240 = vunpack.c.h.b16 %v54
  %v241 = vunpack.c.l.b16 %v55
  %v242 = vunpack.c.h.b16 %v55
  %v243 = vunpack.c.l.b16 %v56
  %v244 = vunpack.c.l.b16 %v57
  %v245 = vunpack.c.h.b16 %v57
  %v246 = vunpack.c.l.b16 %v58
  %v247 = vunpack.c.h.b16 %v58
  %v248 = vunpack.c.l.b16 %v59
  %v249 = vunpack.c.l.b16 %v60
  %v250 = vunpack.c.h.b16 %v60
  %v251 = vunpack.c.l.b16 %v61
  %v252 = vunpack.c.h.b16 %v61
  %v253 = vunpack.c.l.b16 %v62
  %v254 = vunpack.c.l.b16 %v63
  %v255 = vunpack.c.h.b16 %v63
  %v256 = vunpack.c.l.b16 %v64
  %v257 = vunpack.c.h.b16 %v64
  %v258 = vunpack.c.l.b16 %v65
  %v259 = vunpack.c.l.b16 %v66
  %v260 = vunpack.c.h.b16 %v66
  %v261 = vunpack.c.l.b16 %v67
  %v262 = vunpack.c.h.b16 %v67
  %v263 = vunpack.c.l.b16 %v68
  %v264 = vunpack.c.l.b16 %v69
  %v265 = vunpack.c.h.b16 %v69
  %v266 = vunpack.c.l.b16 %v70
  %v267 = vunpack.c.h.b16 %v70
  %v268 = vunpack.c.l.b16 %v71
  %v269 = vunpack.c.l.b16 %v72
  %v270 = vunpack.c.h.b16 %v72
  %v271 = vunpack.c.l.b16 %v73
  %v272 = vunpack.c.h.b16 %v73
  %v273 = vunpack.c.l.b16 %v74
  %v274 = vunpack.c.l.b16 %v75
  %v275 = vunpack.c.h.b16 %v75
  %v276 = vunpack.c.l.b16 %v76
  %v277 = vunpack.c.h.b16 %v76
  %v278 = vunpack.c.l.b16 %v77
  %v279 = vunpack.c.l.b16 %v78
  %v280 = vunpack.c.h.b16 %v78
  %v281 = vunpack.c.l.b16 %v79
  %v282 = vunpack.c.h.b16 %v79
  %v283 = vunpack.c.l.b16 %v80
  %v284 = vunpack.c.l.b16 %v81
  %v285 = vunpack.c.h.b16 %v81
  %v286 = vunpack.c.l.b16 %v82
  %v287 = vunpack.c.h.b16 %v82
  %v288 = vunpack.c.l.b16 %v83
  %v289 = vunpack.c.l.b16 %v84
  %v290 = vunpack.c.h.b16 %v84
  %v291 = vunpack.c.l.b16 %v85
  %v292 = vunpack.c.h.b16 %v85
  %v293 = vunpack.c.l.b16 %v86
  %v294 = vpack.c.b16 %v219, %v214
  %v295 = vpack.c.b16 %v220, %v215
  %v296 = vpack.c.b16 %v221, %v216
  %v297 = vpack.c.b16 %v222, %v217
  %v298 = vpack.c.b16 %v223, %v218
  %v299 = vpack.c.b16 %v229, %v224
  %v300 = vpack.c.b16 %v230, %v225
  %v301 = vpack.c.b16 %v231, %v226
  %v302 = vpack.c.b16 %v232, %v227
  %v303 = vpack.c.b16 %v233, %v228
  %v304 = vpack.c.b16 %v239, %v234
  %v305 = vpack.c.b16 %v240, %v235
  %v306 = vpack.c.b16 %v241, %v236
  %v307 = vpack.c.b16 %v242, %v237
  %v308 = vpack.c.b16 %v243, %v238
  %v309 = vpack.c.b16 %v249, %v244
  %v310 = vpack.c.b16 %v250, %v245
  %v311 = vpack.c.b16 %v251, %v246
  %v312 = vpack.c.b16 %v252, %v247
  %v313 = vpack.c.b16 %v253, %v248
  %v314 = vpack.c.b16 %v259, %v254
  %v315 = vpack.c.b16 %v260, %v255
  %v316 = vpack.c.b16 %v261, %v256
  %v317 = vpack.c.b16 %v262, %v257
  %v318 = vpack.c.b16 %v263, %v258
  %v319 = vpack.c.b16 %v269, %v264
  %v320 = vpack.c.b16 %v270, %v265
  %v321 = vpack.c.b16 %v271, %v266
  %v322 = vpack.c.b16 %v272, %v267
  %v323 = vpack.c.b16 %v273, %v268
  %v324 = vpack.c.b16 %v279, %v274
  %v325 = vpack.c.b16 %v280, %v275
  %v326 = vpack.c.b16 %v281, %v276
  %v327 = vpack.c.b16 %v282, %v277
  %v328 = vpack.c.b16 %v283, %v278
  %v329 = vpack.c.b16 %v289, %v284
  %v330 = vpack.c.b16 %v290, %v285
  %v331 = vpack.c.b16 %v291, %v286
  %v332 = vpack.c.b16 %v292, %v287
  %v333 = vpack.c.b16 %v293, %v288
  %v438 = vunpack.c.l.b16 %v87
  %v439 = vunpack.c.l.b16 %v88
  %v440 = vunpack.c.l.b16 %v89
  %v441 = vunpack.c.l.b16 %v90
  %v442 = vunpack.c.l.b16 %v91
  %v443 = vunpack.c.l.b16 %v92
  %v444 = vunpack.c.l.b16 %v93
  %v445 = vunpack.c.l.b16 %v94
  %v446 = vunpack.c.l.b16 %v95
  %v447 = vunpack.c.l.b16 %v96
  %v448 = vunpack.c.l.b16 %v97
  %v449 = vunpack.c.l.b16 %v98
  %v450 = vunpack.c.l.b16 %v99
  %v451 = vunpack.c.l.b16 %v100
  %v452 = vunpack.c.l.b16 %v101
  %v453 = vunpack.c.l.b16 %v102
  %v454 = vunpack.c.l.b16 %v103
  %v455 = vunpack.c.l.b16 %v104
  %v456 = vunpack.c.l.b16 %v105
  %v457 = vunpack.c.l.b16 %v106
  %v458 = vunpack.c.l.b16 %v107
  %v459 = vunpack.c.l.b16 %v108
  %v460 = vunpack.c.l.b16 %v109
  %v461 = vunpack.c.l.b16 %v110
  %v462 = vunpack.c.l.b16 %v111
  %v463 = vunpack.c.l.b16 %v112
  %v464 = vunpack.c.l.b16 %v113
  %v465 = vunpack.c.l.b16 %v114
  %v466 = vunpack.c.l.b16 %v115
  %v467 = vunpack.c.l.b16 %v116
  %v468 = vunpack.c.l.b16 %v117
  %v469 = vunpack.c.l.b16 %v118
  %v470 = vunpack.c.l.b16 %v119
  %v471 = vunpack.c.l.b16 %v120
  %v472 = vunpack.c.l.b16 %v121
  %v473 = vunpack.c.l.b16 %v122
  %v474 = vunpack.c.l.b16 %v123
  %v475 = vunpack.c.l.b16 %v124
  %v476 = vunpack.c.l.b16 %v125
  %v477 = vunpack.c.l.b16 %v126
  %v478 = vunpack.c.l.b16 %v127
  %v479 = vunpack.c.l.b16 %v128
  %v480 = vunpack.c.l.b16 %v129
  %v481 = vunpack.c.l.b16 %v130
  %v482 = vunpack.c.l.b16 %v131
  %v483 = vunpack.c.l.b16 %v132
  %v484 = vunpack.c.l.b16 %v133
  %v485 = vunpack.c.l.b16 %v134
  %v486 = vunpack.c.l.b16 %v135
  %v487 = vunpack.c.l.b16 %v136
  %v488 = vunpack.c.l.b16 %v137
  %v489 = vunpack.c.l.b16 %v138
  %v490 = vunpack.c.l.b16 %v139
  %v491 = vunpack.c.l.b16 %v140
  %v492 = vunpack.c.l.b16 %v141
  %v493 = vunpack.c.l.b16 %v142
  %v494 = vunpack.c.l.b16 %v143
  %v495 = vunpack.c.l.b16 %v144
  %v496 = vunpack.c.l.b16 %v145
  %v497 = vunpack.c.l.b16 %v146
  %v498 = vunpack.c.l.b16 %v147
  %v499 = vunpack.c.l.b16 %v148
  %v500 = vunpack.c.l.b16 %v149
  %v501 = vunpack.c.l.b16 %v150
  %v502 = vunpack.c.l.b16 %v151
  %v503 = vunpack.c.l.b16 %v152
  %v504 = vunpack.c.l.b16 %v153
  %v505 = vunpack.c.l.b16 %v154
  %v506 = vunpack.c.l.b16 %v155
  %v507 = vunpack.c.l.b16 %v156
  %v508 = vunpack.c.l.b16 %v157
  %v509 = vunpack.c.l.b16 %v158
  %v510 = vpack.c.b16 %v439, %v438
  %v511 = vpack.c.b16 %v441, %v440
  %v512 = vpack.c.b16 %v443, %v442
  %v513 = vpack.c.b16 %v445, %v444
  %v514 = vpack.c.b16 %v447, %v446
  %v515 = vpack.c.b16 %v449, %v448
  %v516 = vpack.c.b16 %v451, %v450
  %v517 = vpack.c.b16 %v453, %v452
  %v518 = vpack.c.b16 %v455, %v454
  %v519 = vpack.c.b16 %v457, %v456
  %v520 = vpack.c.b16 %v459, %v458
  %v521 = vpack.c.b16 %v461, %v460
  %v522 = vpack.c.b16 %v463, %v462
  %v523 = vpack.c.b16 %v465, %v464
  %v524 = vpack.c.b16 %v467, %v466
  %v525 = vpack.c.b16 %v469, %v468
  %v526 = vpack.c.b16 %v471, %v470
  %v527 = vpack.c.b16 %v473, %v472
  %v528 = vpack.c.b16 %v475, %v474
  %v529 = vpack.c.b16 %v477, %v476
  %v530 = vpack.c.b16 %v479, %v478
  %v531 = vpack.c.b16 %v481, %v480
  %v532 = vpack.c.b16 %v483, %v482
  %v533 = vpack.c.b16 %v485, %v484
  %v534 = vpack.c.b16 %v487, %v486
  %v535 = vpack.c.b16 %v489, %v488
  %v536 = vpack.c.b16 %v491, %v490
  %v537 = vpack.c.b16 %v493, %v492
  %v538 = vpack.c.b16 %v495, %v494
  %v539 = vpack.c.b16 %v497, %v496
  %v540 = vpack.c.b16 %v499, %v498
  %v541 = vpack.c.b16 %v501, %v500
  %v542 = vpack.c.b16 %v503, %v502
  %v543 = vpack.c.b16 %v505, %v504
  %v544 = vpack.c.b16 %v507, %v506
  %v545 = vpack.c.b16 %v509, %v508
  %vm582 = vcmask 523264
  %v584 = vsel %vm582, %v298, 0
  %v587 = vsel %vm582, %v303, 0
  %v590 = vsel %vm582, %v308, 0
  %v593 = vsel %vm582, %v313, 0
  %v596 = vsel %vm582, %v318, 0
  %v599 = vsel %vm582, %v323, 0
  %v602 = vsel %vm582, %v328, 0
  %v605 = vsel %vm582, %v333, 0
  %607 = vmatprep.subr.bf16.mxu0 0
  %608 = vmatpush1.bf16.msra.mxu0 %v510
  %609 = vmatprep.subr.bf16.mxu0 0
  %610 = vmatpush1.bf16.msra.mxu0 %v511
  %611 = vmatprep.subr.bf16.mxu0 0
  %612 = vmatpush1.bf16.msra.mxu0 %v512
  %613 = vmatprep.subr.bf16.mxu0 0
  %614 = vmatpush1.bf16.msra.mxu0 %v513
  %615 = vmatprep.subr.bf16.mxu0 0
  %616 = vmatpush1.bf16.msra.mxu0 %v514
  %617 = vmatprep.subr.bf16.mxu0 0
  %618 = vmatpush1.bf16.msra.mxu0 %v515
  %619 = vmatprep.subr.bf16.mxu0 0
  %620 = vmatpush1.bf16.msra.mxu0 %v516
  %621 = vmatprep.subr.bf16.mxu0 0
  %622 = vmatpush1.bf16.msra.mxu0 %v517
  %623 = vmatprep.subr.bf16.mxu0 0
  %624 = vmatpush1.bf16.msra.mxu0 %v518
  %625 = vmatprep.subr.bf16.mxu0 0
  %626 = vmatpush1.bf16.msra.mxu0 %v519
  %627 = vmatprep.subr.bf16.mxu0 0
  %628 = vmatpush1.bf16.msra.mxu0 %v520
  %629 = vmatprep.subr.bf16.mxu0 0
  %630 = vmatpush1.bf16.msra.mxu0 %v521
  %631 = vmatprep.subr.bf16.mxu0 0
  %632 = vmatpush1.bf16.msra.mxu0 %v522
  %633 = vmatprep.subr.bf16.mxu0 0
  %634 = vmatpush1.bf16.msra.mxu0 %v523
  %635 = vmatprep.subr.bf16.mxu0 0
  %636 = vmatpush1.bf16.msra.mxu0 %v524
  %637 = vmatprep.subr.bf16.mxu0 0
  %638 = vmatpush1.bf16.msra.mxu0 %v525
  %639 = vmatprep.mubr.bf16.mxu0 %v295
  %640 = vmatmul.mubr.bf16.gmra.mrb[0].mxu0 %v294
  %v641 = vpop.f32.mrb[0].mxu0
  %v642 = vadd.f32 %v164, %v641
  %v643 = vpop.f32.mrb[0].mxu0
  %v644 = vpop.f32.mrb[0].mxu0
  %v645 = vadd.f32 %v164, %v644
  %v646 = vpop.f32.mrb[0].mxu0
  %647 = vmatprep.mubr.bf16.mxu0 %v300
  %648 = vmatmul.mubr.bf16.gmra.mrb[0].mxu0 %v299
  %v649 = vpop.f32.mrb[0].mxu0
  %v650 = vadd.f32 %v164, %v649
  %v651 = vpop.f32.mrb[0].mxu0
  %v652 = vpop.f32.mrb[0].mxu0
  %v653 = vadd.f32 %v164, %v652
  %v654 = vpop.f32.mrb[0].mxu0
  %655 = vmatprep.mubr.bf16.mxu0 %v305
  %656 = vmatmul.mubr.bf16.gmra.mrb[0].mxu0 %v304
  %v657 = vpop.f32.mrb[0].mxu0
  %v658 = vadd.f32 %v164, %v657
  %v659 = vpop.f32.mrb[0].mxu0
  %v660 = vpop.f32.mrb[0].mxu0
  %v661 = vadd.f32 %v164, %v660
  %v662 = vpop.f32.mrb[0].mxu0
  %663 = vmatprep.mubr.bf16.mxu0 %v310
  %664 = vmatmul.mubr.bf16.gmra.mrb[0].mxu0 %v309
  %v665 = vpop.f32.mrb[0].mxu0
  %v666 = vadd.f32 %v164, %v665
  %v667 = vpop.f32.mrb[0].mxu0
  %v668 = vpop.f32.mrb[0].mxu0
  %v669 = vadd.f32 %v164, %v668
  %v670 = vpop.f32.mrb[0].mxu0
  %671 = vmatprep.mubr.bf16.mxu0 %v315
  %672 = vmatmul.mubr.bf16.gmra.mrb[0].mxu0 %v314
  %v673 = vpop.f32.mrb[0].mxu0
  %v674 = vadd.f32 %v164, %v673
  %v675 = vpop.f32.mrb[0].mxu0
  %v676 = vpop.f32.mrb[0].mxu0
  %v677 = vadd.f32 %v164, %v676
  %v678 = vpop.f32.mrb[0].mxu0
  %679 = vmatprep.mubr.bf16.mxu0 %v320
  %680 = vmatmul.mubr.bf16.gmra.mrb[0].mxu0 %v319
  %v681 = vpop.f32.mrb[0].mxu0
  %v682 = vadd.f32 %v164, %v681
  %v683 = vpop.f32.mrb[0].mxu0
  %v684 = vpop.f32.mrb[0].mxu0
  %v685 = vadd.f32 %v164, %v684
  %v686 = vpop.f32.mrb[0].mxu0
  %687 = vmatprep.mubr.bf16.mxu0 %v325
  %688 = vmatmul.mubr.bf16.gmra.mrb[0].mxu0 %v324
  %v689 = vpop.f32.mrb[0].mxu0
  %v690 = vadd.f32 %v164, %v689
  %v691 = vpop.f32.mrb[0].mxu0
  %v692 = vpop.f32.mrb[0].mxu0
  %v693 = vadd.f32 %v164, %v692
  %v694 = vpop.f32.mrb[0].mxu0
  %695 = vmatprep.mubr.bf16.mxu0 %v330
  %696 = vmatmul.mubr.bf16.gmra.mrb[0].mxu0 %v329
  %v697 = vpop.f32.mrb[0].mxu0
  %v698 = vadd.f32 %v164, %v697
  %v699 = vpop.f32.mrb[0].mxu0
  %v700 = vpop.f32.mrb[0].mxu0
  %v701 = vadd.f32 %v164, %v700
  %v702 = vpop.f32.mrb[0].mxu0
  %703 = vdwg.mxu0
  %704 = vmatprep.subr.bf16.mxu0 0
  %705 = vmatpush1.bf16.msra.mxu0 %v526
  %706 = vmatprep.subr.bf16.mxu0 0
  %707 = vmatpush1.bf16.msra.mxu0 %v527
  %708 = vmatprep.subr.bf16.mxu0 0
  %709 = vmatpush1.bf16.msra.mxu0 %v528
  %710 = vmatprep.subr.bf16.mxu0 0
  %711 = vmatpush1.bf16.msra.mxu0 %v529
  %712 = vmatprep.subr.bf16.mxu0 0
  %713 = vmatpush1.bf16.msra.mxu0 %v530
  %714 = vmatprep.subr.bf16.mxu0 0
  %715 = vmatpush1.bf16.msra.mxu0 %v531
  %716 = vmatprep.subr.bf16.mxu0 0
  %717 = vmatpush1.bf16.msra.mxu0 %v532
  %718 = vmatprep.subr.bf16.mxu0 0
  %719 = vmatpush1.bf16.msra.mxu0 %v533
  %720 = vmatprep.subr.bf16.mxu0 0
  %721 = vmatpush1.bf16.msra.mxu0 %v534
  %722 = vmatprep.subr.bf16.mxu0 0
  %723 = vmatpush1.bf16.msra.mxu0 %v535
  %724 = vmatprep.subr.bf16.mxu0 0
  %725 = vmatpush1.bf16.msra.mxu0 %v536
  %726 = vmatprep.subr.bf16.mxu0 0
  %727 = vmatpush1.bf16.msra.mxu0 %v537
  %728 = vmatprep.subr.bf16.mxu0 0
  %729 = vmatpush1.bf16.msra.mxu0 %v538
  %730 = vmatprep.subr.bf16.mxu0 0
  %731 = vmatpush1.bf16.msra.mxu0 %v539
  %732 = vmatprep.subr.bf16.mxu0 0
  %733 = vmatpush1.bf16.msra.mxu0 %v540
  %734 = vmatprep.subr.bf16.mxu0 0
  %735 = vmatpush1.bf16.msra.mxu0 %v541
  %736 = vmatprep.mubr.bf16.mxu0 %v297
  %737 = vmatmul.mubr.bf16.gmra.mrb[0].mxu0 %v296
  %v738 = vpop.f32.mrb[0].mxu0
  %v739 = vadd.f32 %v642, %v738
  %v740 = vpop.f32.mrb[0].mxu0
  %v741 = vpop.f32.mrb[0].mxu0
  %v742 = vadd.f32 %v645, %v741
  %v743 = vpop.f32.mrb[0].mxu0
  %744 = vmatprep.mubr.bf16.mxu0 %v302
  %745 = vmatmul.mubr.bf16.gmra.mrb[0].mxu0 %v301
  %v746 = vpop.f32.mrb[0].mxu0
  %v747 = vadd.f32 %v650, %v746
  %v748 = vpop.f32.mrb[0].mxu0
  %v749 = vpop.f32.mrb[0].mxu0
  %v750 = vadd.f32 %v653, %v749
  %v751 = vpop.f32.mrb[0].mxu0
  %752 = vmatprep.mubr.bf16.mxu0 %v307
  %753 = vmatmul.mubr.bf16.gmra.mrb[0].mxu0 %v306
  %v754 = vpop.f32.mrb[0].mxu0
  %v755 = vadd.f32 %v658, %v754
  %v756 = vpop.f32.mrb[0].mxu0
  %v757 = vpop.f32.mrb[0].mxu0
  %v758 = vadd.f32 %v661, %v757
  %v759 = vpop.f32.mrb[0].mxu0
  %760 = vmatprep.mubr.bf16.mxu0 %v312
  %761 = vmatmul.mubr.bf16.gmra.mrb[0].mxu0 %v311
  %v762 = vpop.f32.mrb[0].mxu0
  %v763 = vadd.f32 %v666, %v762
  %v764 = vpop.f32.mrb[0].mxu0
  %v765 = vpop.f32.mrb[0].mxu0
  %v766 = vadd.f32 %v669, %v765
  %v767 = vpop.f32.mrb[0].mxu0
  %768 = vmatprep.mubr.bf16.mxu0 %v317
  %769 = vmatmul.mubr.bf16.gmra.mrb[0].mxu0 %v316
  %v770 = vpop.f32.mrb[0].mxu0
  %v771 = vadd.f32 %v674, %v770
  %v772 = vpop.f32.mrb[0].mxu0
  %v773 = vpop.f32.mrb[0].mxu0
  %v774 = vadd.f32 %v677, %v773
  %v775 = vpop.f32.mrb[0].mxu0
  %776 = vmatprep.mubr.bf16.mxu0 %v322
  %777 = vmatmul.mubr.bf16.gmra.mrb[0].mxu0 %v321
  %v778 = vpop.f32.mrb[0].mxu0
  %v779 = vadd.f32 %v682, %v778
  %v780 = vpop.f32.mrb[0].mxu0
  %v781 = vpop.f32.mrb[0].mxu0
  %v782 = vadd.f32 %v685, %v781
  %v783 = vpop.f32.mrb[0].mxu0
  %784 = vmatprep.mubr.bf16.mxu0 %v327
  %785 = vmatmul.mubr.bf16.gmra.mrb[0].mxu0 %v326
  %v786 = vpop.f32.mrb[0].mxu0
  %v787 = vadd.f32 %v690, %v786
  %v788 = vpop.f32.mrb[0].mxu0
  %v789 = vpop.f32.mrb[0].mxu0
  %v790 = vadd.f32 %v693, %v789
  %v791 = vpop.f32.mrb[0].mxu0
  %792 = vmatprep.mubr.bf16.mxu0 %v332
  %793 = vmatmul.mubr.bf16.gmra.mrb[0].mxu0 %v331
  %v794 = vpop.f32.mrb[0].mxu0
  %v795 = vadd.f32 %v698, %v794
  %v796 = vpop.f32.mrb[0].mxu0
  %v797 = vpop.f32.mrb[0].mxu0
  %v798 = vadd.f32 %v701, %v797
  %v799 = vpop.f32.mrb[0].mxu0
  %800 = vdwg.mxu0
  %801 = vmatprep.subr.bf16.mxu0 0
  %802 = vmatpush1.bf16.msra.mxu0 %v542
  %803 = vmatprep.subr.bf16.mxu0 0
  %804 = vmatpush1.bf16.msra.mxu0 %v543
  %805 = vmatprep.subr.bf16.mxu0 0
  %806 = vmatpush1.bf16.msra.mxu0 %v544
  %807 = vmatprep.subr.bf16.mxu0 0
  %808 = vmatpush1.bf16.msra.mxu0 %v545
  %809 = vmatprep.subr.bf16.mxu0 0
  %810 = vmatpush1.bf16.msra.mxu0 0
  %811 = vmatprep.subr.bf16.mxu0 0
  %812 = vmatpush1.bf16.msra.mxu0 0
  %813 = vmatprep.subr.bf16.mxu0 0
  %814 = vmatpush1.bf16.msra.mxu0 0
  %815 = vmatprep.subr.bf16.mxu0 0
  %816 = vmatpush1.bf16.msra.mxu0 0
  %817 = vmatprep.subr.bf16.mxu0 0
  %818 = vmatpush1.bf16.msra.mxu0 0
  %819 = vmatprep.subr.bf16.mxu0 0
  %820 = vmatpush1.bf16.msra.mxu0 0
  %821 = vmatprep.subr.bf16.mxu0 0
  %822 = vmatpush1.bf16.msra.mxu0 0
  %823 = vmatprep.subr.bf16.mxu0 0
  %824 = vmatpush1.bf16.msra.mxu0 0
  %825 = vmatprep.subr.bf16.mxu0 0
  %826 = vmatpush1.bf16.msra.mxu0 0
  %827 = vmatprep.subr.bf16.mxu0 0
  %828 = vmatpush1.bf16.msra.mxu0 0
  %829 = vmatprep.subr.bf16.mxu0 0
  %830 = vmatpush1.bf16.msra.mxu0 0
  %831 = vmatprep.subr.bf16.mxu0 0
  %832 = vmatpush1.bf16.msra.mxu0 0
  %833 = vmatprep.mubr.bf16.mxu0 0
  %834 = vmatmul.mubr.bf16.gmra.mrb[0].mxu0 %v584
  %v835 = vpop.f32.mrb[0].mxu0
  %v836 = vadd.f32 %v739, %v835
  %v837 = vpop.f32.mrb[0].mxu0
  %v838 = vpop.f32.mrb[0].mxu0
  %v839 = vadd.f32 %v742, %v838
  %v840 = vpop.f32.mrb[0].mxu0
  %841 = vmatprep.mubr.bf16.mxu0 0
  %842 = vmatmul.mubr.bf16.gmra.mrb[0].mxu0 %v587
  %v843 = vpop.f32.mrb[0].mxu0
  %v844 = vadd.f32 %v747, %v843
  %v845 = vpop.f32.mrb[0].mxu0
  %v846 = vpop.f32.mrb[0].mxu0
  %v847 = vadd.f32 %v750, %v846
  %v848 = vpop.f32.mrb[0].mxu0
  %849 = vmatprep.mubr.bf16.mxu0 0
  %850 = vmatmul.mubr.bf16.gmra.mrb[0].mxu0 %v590
  %v851 = vpop.f32.mrb[0].mxu0
  %v852 = vadd.f32 %v755, %v851
  %v853 = vpop.f32.mrb[0].mxu0
  %v854 = vpop.f32.mrb[0].mxu0
  %v855 = vadd.f32 %v758, %v854
  %v856 = vpop.f32.mrb[0].mxu0
  %857 = vmatprep.mubr.bf16.mxu0 0
  %858 = vmatmul.mubr.bf16.gmra.mrb[0].mxu0 %v593
  %v859 = vpop.f32.mrb[0].mxu0
  %v860 = vadd.f32 %v763, %v859
  %v861 = vpop.f32.mrb[0].mxu0
  %v862 = vpop.f32.mrb[0].mxu0
  %v863 = vadd.f32 %v766, %v862
  %v864 = vpop.f32.mrb[0].mxu0
  %865 = vmatprep.mubr.bf16.mxu0 0
  %866 = vmatmul.mubr.bf16.gmra.mrb[0].mxu0 %v596
  %v867 = vpop.f32.mrb[0].mxu0
  %v868 = vadd.f32 %v771, %v867
  %v869 = vpop.f32.mrb[0].mxu0
  %v870 = vpop.f32.mrb[0].mxu0
  %v871 = vadd.f32 %v774, %v870
  %v872 = vpop.f32.mrb[0].mxu0
  %873 = vmatprep.mubr.bf16.mxu0 0
  %874 = vmatmul.mubr.bf16.gmra.mrb[0].mxu0 %v599
  %v875 = vpop.f32.mrb[0].mxu0
  %v876 = vadd.f32 %v779, %v875
  %v877 = vpop.f32.mrb[0].mxu0
  %v878 = vpop.f32.mrb[0].mxu0
  %v879 = vadd.f32 %v782, %v878
  %v880 = vpop.f32.mrb[0].mxu0
  %881 = vmatprep.mubr.bf16.mxu0 0
  %882 = vmatmul.mubr.bf16.gmra.mrb[0].mxu0 %v602
  %v883 = vpop.f32.mrb[0].mxu0
  %v884 = vadd.f32 %v787, %v883
  %v885 = vpop.f32.mrb[0].mxu0
  %v886 = vpop.f32.mrb[0].mxu0
  %v887 = vadd.f32 %v790, %v886
  %v888 = vpop.f32.mrb[0].mxu0
  %889 = vmatprep.mubr.bf16.mxu0 0
  %890 = vmatmul.mubr.bf16.gmra.mrb[0].mxu0 %v605
  %v891 = vpop.f32.mrb[0].mxu0
  %v892 = vadd.f32 %v795, %v891
  %v893 = vpop.f32.mrb[0].mxu0
  %v894 = vpop.f32.mrb[0].mxu0
  %v895 = vadd.f32 %v798, %v894
  %v896 = vpop.f32.mrb[0].mxu0
  %897 = vdwg.mxu0
  %vm898 = vcmask 64512
  %v899 = vsel %vm898, %v836, 0.0
  %v900 = vsel %vm898, %v839, 0.0
  %v901 = vadd.f32 %v899, %v900
  %v902 = vsel %vm898, %v844, 0.0
  %v903 = vadd.f32 %v901, %v902
  %v904 = vsel %vm898, %v847, 0.0
  %v905 = vadd.f32 %v903, %v904
  %v906 = vsel %vm898, %v852, 0.0
  %v907 = vadd.f32 %v905, %v906
  %v908 = vsel %vm898, %v855, 0.0
  %v909 = vadd.f32 %v907, %v908
  %v910 = vsel %vm898, %v860, 0.0
  %v911 = vadd.f32 %v909, %v910
  %v912 = vsel %vm898, %v863, 0.0
  %v913 = vadd.f32 %v911, %v912
  %v914 = vsel %vm898, %v868, 0.0
  %v915 = vadd.f32 %v913, %v914
  %v916 = vsel %vm898, %v871, 0.0
  %v917 = vadd.f32 %v915, %v916
  %v918 = vsel %vm898, %v876, 0.0
  %v919 = vadd.f32 %v917, %v918
  %v920 = vsel %vm898, %v879, 0.0
  %v921 = vadd.f32 %v919, %v920
  %v922 = vsel %vm898, %v884, 0.0
  %v923 = vadd.f32 %v921, %v922
  %v924 = vsel %vm898, %v887, 0.0
  %v925 = vadd.f32 %v923, %v924
  %v926 = vsel %vm898, %v892, 0.0
  %v927 = vadd.f32 %v925, %v926
  %v928 = vsel %vm898, %v895, 0.0
  %v929 = vadd.f32 %v927, %v928
  %v930 = vrot.slane %v929, 4
  %v931 = vadd.f32 %v929, %v930
  %v932 = vrot.slane %v931, 2
  %v933 = vadd.f32 %v931, %v932
  %v934 = vrot.slane %v933, 1
  %v935 = vadd.f32 %v933, %v934
  %v936 = vmul.f32 %v935, 0.0078125
  %v937 = vsub.f32 %v836, %v936
  %v938 = vsub.f32 %v839, %v936
  %v939 = vsub.f32 %v844, %v936
  %v940 = vsub.f32 %v847, %v936
  %v941 = vsub.f32 %v852, %v936
  %v942 = vsub.f32 %v855, %v936
  %v943 = vsub.f32 %v860, %v936
  %v944 = vsub.f32 %v863, %v936
  %v945 = vsub.f32 %v868, %v936
  %v946 = vsub.f32 %v871, %v936
  %v947 = vsub.f32 %v876, %v936
  %v948 = vsub.f32 %v879, %v936
  %v949 = vsub.f32 %v884, %v936
  %v950 = vsub.f32 %v887, %v936
  %v951 = vsub.f32 %v892, %v936
  %v952 = vsub.f32 %v895, %v936
  %v953 = vmul.f32 %v937, %v937
  %v954 = vmul.f32 %v938, %v938
  %v955 = vmul.f32 %v939, %v939
  %v956 = vmul.f32 %v940, %v940
  %v957 = vmul.f32 %v941, %v941
  %v958 = vmul.f32 %v942, %v942
  %v959 = vmul.f32 %v943, %v943
  %v960 = vmul.f32 %v944, %v944
  %v961 = vmul.f32 %v945, %v945
  %v962 = vmul.f32 %v946, %v946
  %v963 = vmul.f32 %v947, %v947
  %v964 = vmul.f32 %v948, %v948
  %v965 = vmul.f32 %v949, %v949
  %v966 = vmul.f32 %v950, %v950
  %v967 = vmul.f32 %v951, %v951
  %v968 = vmul.f32 %v952, %v952
  %v969 = vsel %vm898, %v953, 0.0
  %v970 = vsel %vm898, %v954, 0.0
  %v971 = vadd.f32 %v969, %v970
  %v972 = vsel %vm898, %v955, 0.0
  %v973 = vadd.f32 %v971, %v972
  %v974 = vsel %vm898, %v956, 0.0
  %v975 = vadd.f32 %v973, %v974
  %v976 = vsel %vm898, %v957, 0.0
  %v977 = vadd.f32 %v975, %v976
  %v978 = vsel %vm898, %v958, 0.0
  %v979 = vadd.f32 %v977, %v978
  %v980 = vsel %vm898, %v959, 0.0
  %v981 = vadd.f32 %v979, %v980
  %v982 = vsel %vm898, %v960, 0.0
  %v983 = vadd.f32 %v981, %v982
  %v984 = vsel %vm898, %v961, 0.0
  %v985 = vadd.f32 %v983, %v984
  %v986 = vsel %vm898, %v962, 0.0
  %v987 = vadd.f32 %v985, %v986
  %v988 = vsel %vm898, %v963, 0.0
  %v989 = vadd.f32 %v987, %v988
  %v990 = vsel %vm898, %v964, 0.0
  %v991 = vadd.f32 %v989, %v990
  %v992 = vsel %vm898, %v965, 0.0
  %v993 = vadd.f32 %v991, %v992
  %v994 = vsel %vm898, %v966, 0.0
  %v995 = vadd.f32 %v993, %v994
  %v996 = vsel %vm898, %v967, 0.0
  %v997 = vadd.f32 %v995, %v996
  %v998 = vsel %vm898, %v968, 0.0
  %v999 = vadd.f32 %v997, %v998
  %v1000 = vrot.slane %v999, 4
  %v1001 = vadd.f32 %v999, %v1000
  %v1002 = vrot.slane %v1001, 2
  %v1003 = vadd.f32 %v1001, %v1002
  %v1004 = vrot.slane %v1003, 1
  %v1005 = vadd.f32 %v1003, %v1004
  %v1006 = vmul.f32 %v1005, 0.0078125
  %v1007 = vadd.f32 %v1006, 1e-05
  %v1008 = vrsqrt.pop %v1007
  %v1009 = vld [vmem:[%s5] sm:$0x1]
  %v1010 = vmul.f32 %v1009, %v1008
  %v1011 = vld [vmem:[%s6] sm:$0x1]
  %v1012 = vmul.f32 %v936, %v1010
  %v1013 = vsub.f32 %v1011, %v1012
  %v1014 = vld [vmem:[%s2] sm:$0x3]
  %v1015 = vxor.u32 %v1014, 2147483648
  %v1016 = vmul.f32 %v1015, 1.442695
  %v1017 = vpow.pop %v1016
  %v1018 = vadd.f32 %v1017, 1.0
  %v1019 = vrcp.pop %v1018
  %v1020 = vmul.f32 1.0, %v1019
  %v1021 = vmul.f32 %v1014, %v1020
  %v1022 = vld [vmem:[%s7] sm:$0xff]
  %v1023 = vld [vmem:[%s7 + $0x8] sm:$0xff]
  %v1024 = vld [vmem:[%s8] sm:$0x1]
  %v1026 = vlaneseq
  %v1027 = vshrl.u32 %v1026, 7
  %v1028 = vsub.s32 0, %v1027
  %v1029 = vrot.slane %v1024, %v1028
  %vm1031 = vcmask 130048
  %v1033 = vsel %vm1031, %v1021, 0
  %1035 = vmatprep.subr.mxu0 0.0
  %1036 = vmatpush1.msra.mxu0 %v1022
  %1037 = vmatprep.subr.mxu0 0.0
  %1038 = vmatpush1.msra.mxu0 %v1023
  %1039 = vmatprep.subr.mxu0 0.0
  %1040 = vmatpush1.msra.mxu0 0.0
  %1041 = vmatprep.subr.mxu0 0.0
  %1042 = vmatpush1.msra.mxu0 0.0
  %1043 = vmatprep.subr.mxu0 0.0
  %1044 = vmatpush1.msra.mxu0 0.0
  %1045 = vmatprep.subr.mxu0 0.0
  %1046 = vmatpush1.msra.mxu0 0.0
  %1047 = vmatprep.subr.mxu0 0.0
  %1048 = vmatpush1.msra.mxu0 0.0
  %1049 = vmatprep.subr.mxu0 0.0
  %1050 = vmatpush1.msra.mxu0 0.0
  %1051 = vmatprep.subr.mxu0 0.0
  %1052 = vmatpush1.msra.mxu0 0.0
  %1053 = vmatprep.subr.mxu0 0.0
  %1054 = vmatpush1.msra.mxu0 0.0
  %1055 = vmatprep.subr.mxu0 0.0
  %1056 = vmatpush1.msra.mxu0 0.0
  %1057 = vmatprep.subr.mxu0 0.0
  %1058 = vmatpush1.msra.mxu0 0.0
  %1059 = vmatprep.subr.mxu0 0.0
  %1060 = vmatpush1.msra.mxu0 0.0
  %1061 = vmatprep.subr.mxu0 0.0
  %1062 = vmatpush1.msra.mxu0 0.0
  %1063 = vmatprep.subr.mxu0 0.0
  %1064 = vmatpush1.msra.mxu0 0.0
  %1065 = vmatprep.subr.mxu0 0.0
  %1066 = vmatpush1.msra.mxu0 0.0
  %1067 = vmatprep.subr.mxu0 0.0
  %1068 = vmatpush1.msra.mxu0 0.0
  %1069 = vmatprep.subr.mxu0 0.0
  %1070 = vmatpush1.msra.mxu0 0.0
  %1071 = vmatprep.subr.mxu0 0.0
  %1072 = vmatpush1.msra.mxu0 0.0
  %1073 = vmatprep.subr.mxu0 0.0
  %1074 = vmatpush1.msra.mxu0 0.0
  %1075 = vmatprep.subr.mxu0 0.0
  %1076 = vmatpush1.msra.mxu0 0.0
  %1077 = vmatprep.subr.mxu0 0.0
  %1078 = vmatpush1.msra.mxu0 0.0
  %1079 = vmatprep.subr.mxu0 0.0
  %1080 = vmatpush1.msra.mxu0 0.0
  %1081 = vmatprep.subr.mxu0 0.0
  %1082 = vmatpush1.msra.mxu0 0.0
  %1083 = vmatprep.subr.mxu0 0.0
  %1084 = vmatpush1.msra.mxu0 0.0
  %1085 = vmatprep.subr.mxu0 0.0
  %1086 = vmatpush1.msra.mxu0 0.0
  %1087 = vmatprep.subr.mxu0 0.0
  %1088 = vmatpush1.msra.mxu0 0.0
  %1089 = vmatprep.subr.mxu0 0.0
  %1090 = vmatpush1.msra.mxu0 0.0
  %1091 = vmatprep.subr.mxu0 0.0
  %1092 = vmatpush1.msra.mxu0 0.0
  %1093 = vmatprep.subr.mxu0 0.0
  %1094 = vmatpush1.msra.mxu0 0.0
  %1095 = vmatprep.subr.mxu0 0.0
  %1096 = vmatpush1.msra.mxu0 0.0
  %1097 = vmatprep.subr.mxu0 0.0
  %1098 = vmatpush1.msra.mxu0 0.0
  %1099 = vmatprep.mubr.f32.mxu0 0.0
  %1100 = vmatmul.mubr.f32.gmra.mrb[0].mxu0 %v1033
  %v1101 = vpop.f32.mrb[0].mxu0
  %v1102 = vadd.f32 %v1029, %v1101
  %v1103 = vpop.f32.mrb[0].mxu0
  %1104 = vdwg.mxu0
  %v1105 = vadd.f32 %v1102, 1.0
  %v1107 = vlaneseq
  %v1108 = vshrl.u32 %v1107, 7
  %v1109 = vsub.s32 0, %v1108
  %v1110 = vrot.slane %v1010, %v1109
  %v1112 = vmul.f32 %v1110, %v1105
  %v1114 = vlaneseq
  %v1115 = vshrl.u32 %v1114, 7
  %v1116 = vsub.s32 0, %v1115
  %v1117 = vrot.slane %v1013, %v1116
  %v1119 = vmul.f32 %v1117, %v1105
  %1121 = vrot.lane.b32.xlu0 %v1102, 120
  %v1122 = vpop.permute.xlu0 %1121
  %v1124 = vadd.f32 %v1119, %v1122
  %v1125 = vlaneseq
  %v1126 = vshrl.u32 %v1125, 7
  %v1127 = vsub.s32 0, %v1126
  %v1128 = vrot.slane %v1112, %v1127
  %v1129 = vmul.f32 %v836, %v1128
  %v1130 = vmul.f32 %v839, %v1128
  %v1131 = vmul.f32 %v844, %v1128
  %v1132 = vmul.f32 %v847, %v1128
  %v1133 = vmul.f32 %v852, %v1128
  %v1134 = vmul.f32 %v855, %v1128
  %v1135 = vmul.f32 %v860, %v1128
  %v1136 = vmul.f32 %v863, %v1128
  %v1137 = vlaneseq
  %v1138 = vshrl.u32 %v1137, 7
  %v1139 = vsub.s32 0, %v1138
  %v1140 = vrot.slane %v1124, %v1139
  %v1141 = vadd.f32 %v1129, %v1140
  %v1142 = vadd.f32 %v1130, %v1140
  %v1143 = vadd.f32 %v1131, %v1140
  %v1144 = vadd.f32 %v1132, %v1140
  %v1145 = vadd.f32 %v1133, %v1140
  %v1146 = vadd.f32 %v1134, %v1140
  %v1147 = vadd.f32 %v1135, %v1140
  %v1148 = vadd.f32 %v1136, %v1140
  %v1149 = vmul.f32 %v1141, 0.5
  %v1150 = vmul.f32 %v1142, 0.5
  %v1151 = vmul.f32 %v1143, 0.5
  %v1152 = vmul.f32 %v1144, 0.5
  %v1153 = vmul.f32 %v1145, 0.5
  %v1154 = vmul.f32 %v1146, 0.5
  %v1155 = vmul.f32 %v1147, 0.5
  %v1156 = vmul.f32 %v1148, 0.5
  %v1157 = vmul.f32 %v1141, 0.70710677
  %v1158 = vmul.f32 %v1142, 0.70710677
  %v1159 = vmul.f32 %v1143, 0.70710677
  %v1160 = vmul.f32 %v1144, 0.70710677
  %v1161 = vmul.f32 %v1145, 0.70710677
  %v1162 = vmul.f32 %v1146, 0.70710677
  %v1163 = vmul.f32 %v1147, 0.70710677
  %v1164 = vmul.f32 %v1148, 0.70710677
  %v1165 = verf.f32.pop %v1157
  %v1166 = verf.f32.pop %v1158
  %v1167 = verf.f32.pop %v1159
  %v1168 = verf.f32.pop %v1160
  %v1169 = verf.f32.pop %v1161
  %v1170 = verf.f32.pop %v1162
  %v1171 = verf.f32.pop %v1163
  %v1172 = verf.f32.pop %v1164
  %v1173 = vadd.f32 %v1165, 1.0
  %v1174 = vadd.f32 %v1166, 1.0
  %v1175 = vadd.f32 %v1167, 1.0
  %v1176 = vadd.f32 %v1168, 1.0
  %v1177 = vadd.f32 %v1169, 1.0
  %v1178 = vadd.f32 %v1170, 1.0
  %v1179 = vadd.f32 %v1171, 1.0
  %v1180 = vadd.f32 %v1172, 1.0
  %v1181 = vmul.f32 %v1149, %v1173
  %v1182 = vmul.f32 %v1150, %v1174
  %v1183 = vmul.f32 %v1151, %v1175
  %v1184 = vmul.f32 %v1152, %v1176
  %v1185 = vmul.f32 %v1153, %v1177
  %v1186 = vmul.f32 %v1154, %v1178
  %v1187 = vmul.f32 %v1155, %v1179
  %v1188 = vmul.f32 %v1156, %v1180
  %v1189 = vld [vmem:[%s9] sm:$0xff]
  %v1190 = vld [vmem:[%s10] sm:$0x1]
  %v1192 = vlaneseq
  %v1193 = vshrl.u32 %v1192, 7
  %v1194 = vsub.s32 0, %v1193
  %v1195 = vrot.slane %v1190, %v1194
  %v1198 = vsel %vm898, %v1181, 0
  %v1201 = vsel %vm898, %v1182, 0
  %v1204 = vsel %vm898, %v1183, 0
  %v1207 = vsel %vm898, %v1184, 0
  %v1210 = vsel %vm898, %v1185, 0
  %v1213 = vsel %vm898, %v1186, 0
  %v1216 = vsel %vm898, %v1187, 0
  %v1219 = vsel %vm898, %v1188, 0
  %1221 = vmatprep.subr.mxu0 0.0
  %1222 = vmatpush1.msra.mxu0 %v1189
  %1223 = vmatprep.subr.mxu0 0.0
  %1224 = vmatpush1.msra.mxu0 0.0
  %1225 = vmatprep.subr.mxu0 0.0
  %1226 = vmatpush1.msra.mxu0 0.0
  %1227 = vmatprep.subr.mxu0 0.0
  %1228 = vmatpush1.msra.mxu0 0.0
  %1229 = vmatprep.subr.mxu0 0.0
  %1230 = vmatpush1.msra.mxu0 0.0
  %1231 = vmatprep.subr.mxu0 0.0
  %1232 = vmatpush1.msra.mxu0 0.0
  %1233 = vmatprep.subr.mxu0 0.0
  %1234 = vmatpush1.msra.mxu0 0.0
  %1235 = vmatprep.subr.mxu0 0.0
  %1236 = vmatpush1.msra.mxu0 0.0
  %1237 = vmatprep.subr.mxu0 0.0
  %1238 = vmatpush1.msra.mxu0 0.0
  %1239 = vmatprep.subr.mxu0 0.0
  %1240 = vmatpush1.msra.mxu0 0.0
  %1241 = vmatprep.subr.mxu0 0.0
  %1242 = vmatpush1.msra.mxu0 0.0
  %1243 = vmatprep.subr.mxu0 0.0
  %1244 = vmatpush1.msra.mxu0 0.0
  %1245 = vmatprep.subr.mxu0 0.0
  %1246 = vmatpush1.msra.mxu0 0.0
  %1247 = vmatprep.subr.mxu0 0.0
  %1248 = vmatpush1.msra.mxu0 0.0
  %1249 = vmatprep.subr.mxu0 0.0
  %1250 = vmatpush1.msra.mxu0 0.0
  %1251 = vmatprep.subr.mxu0 0.0
  %1252 = vmatpush1.msra.mxu0 0.0
  %1253 = vmatprep.subr.mxu0 0.0
  %1254 = vmatpush1.msra.mxu0 0.0
  %1255 = vmatprep.subr.mxu0 0.0
  %1256 = vmatpush1.msra.mxu0 0.0
  %1257 = vmatprep.subr.mxu0 0.0
  %1258 = vmatpush1.msra.mxu0 0.0
  %1259 = vmatprep.subr.mxu0 0.0
  %1260 = vmatpush1.msra.mxu0 0.0
  %1261 = vmatprep.subr.mxu0 0.0
  %1262 = vmatpush1.msra.mxu0 0.0
  %1263 = vmatprep.subr.mxu0 0.0
  %1264 = vmatpush1.msra.mxu0 0.0
  %1265 = vmatprep.subr.mxu0 0.0
  %1266 = vmatpush1.msra.mxu0 0.0
  %1267 = vmatprep.subr.mxu0 0.0
  %1268 = vmatpush1.msra.mxu0 0.0
  %1269 = vmatprep.subr.mxu0 0.0
  %1270 = vmatpush1.msra.mxu0 0.0
  %1271 = vmatprep.subr.mxu0 0.0
  %1272 = vmatpush1.msra.mxu0 0.0
  %1273 = vmatprep.subr.mxu0 0.0
  %1274 = vmatpush1.msra.mxu0 0.0
  %1275 = vmatprep.subr.mxu0 0.0
  %1276 = vmatpush1.msra.mxu0 0.0
  %1277 = vmatprep.subr.mxu0 0.0
  %1278 = vmatpush1.msra.mxu0 0.0
  %1279 = vmatprep.subr.mxu0 0.0
  %1280 = vmatpush1.msra.mxu0 0.0
  %1281 = vmatprep.subr.mxu0 0.0
  %1282 = vmatpush1.msra.mxu0 0.0
  %1283 = vmatprep.subr.mxu0 0.0
  %1284 = vmatpush1.msra.mxu0 0.0
  %1285 = vmatprep.mubr.f32.mxu0 0.0
  %1286 = vmatmul.mubr.f32.gmra.mrb[0].mxu0 %v1198
  %v1287 = vpop.f32.mrb[0].mxu0
  %v1288 = vadd.f32 %v1195, %v1287
  %v1289 = vpop.f32.mrb[0].mxu0
  %1290 = vmatprep.mubr.f32.mxu0 0.0
  %1291 = vmatmul.mubr.f32.gmra.mrb[0].mxu0 %v1201
  %v1292 = vpop.f32.mrb[0].mxu0
  %v1293 = vadd.f32 %v1195, %v1292
  %v1294 = vpop.f32.mrb[0].mxu0
  %1295 = vmatprep.mubr.f32.mxu0 0.0
  %1296 = vmatmul.mubr.f32.gmra.mrb[0].mxu0 %v1204
  %v1297 = vpop.f32.mrb[0].mxu0
  %v1298 = vadd.f32 %v1195, %v1297
  %v1299 = vpop.f32.mrb[0].mxu0
  %1300 = vmatprep.mubr.f32.mxu0 0.0
  %1301 = vmatmul.mubr.f32.gmra.mrb[0].mxu0 %v1207
  %v1302 = vpop.f32.mrb[0].mxu0
  %v1303 = vadd.f32 %v1195, %v1302
  %v1304 = vpop.f32.mrb[0].mxu0
  %1305 = vmatprep.mubr.f32.mxu0 0.0
  %1306 = vmatmul.mubr.f32.gmra.mrb[0].mxu0 %v1210
  %v1307 = vpop.f32.mrb[0].mxu0
  %v1308 = vadd.f32 %v1195, %v1307
  %v1309 = vpop.f32.mrb[0].mxu0
  %1310 = vmatprep.mubr.f32.mxu0 0.0
  %1311 = vmatmul.mubr.f32.gmra.mrb[0].mxu0 %v1213
  %v1312 = vpop.f32.mrb[0].mxu0
  %v1313 = vadd.f32 %v1195, %v1312
  %v1314 = vpop.f32.mrb[0].mxu0
  %1315 = vmatprep.mubr.f32.mxu0 0.0
  %1316 = vmatmul.mubr.f32.gmra.mrb[0].mxu0 %v1216
  %v1317 = vpop.f32.mrb[0].mxu0
  %v1318 = vadd.f32 %v1195, %v1317
  %v1319 = vpop.f32.mrb[0].mxu0
  %1320 = vmatprep.mubr.f32.mxu0 0.0
  %1321 = vmatmul.mubr.f32.gmra.mrb[0].mxu0 %v1219
  %v1322 = vpop.f32.mrb[0].mxu0
  %v1323 = vadd.f32 %v1195, %v1322
  %v1324 = vpop.f32.mrb[0].mxu0
  %1325 = vdwg.mxu0
  %v1326 = vld [vmem:[%s1] sm:$0xff]
  %v1327 = vld [vmem:[%s1 + $0x8] sm:$0xff]
  %v1328 = vld [vmem:[%s1 + $0x10] sm:$0xff]
  %v1329 = vld [vmem:[%s1 + $0x18] sm:$0xff]
  %v1330 = vld [vmem:[%s1 + $0x20] sm:$0xff]
  %v1331 = vld [vmem:[%s1 + $0x28] sm:$0xff]
  %v1332 = vld [vmem:[%s1 + $0x30] sm:$0xff]
  %v1333 = vld [vmem:[%s1 + $0x38] sm:$0xff]
  %1342 = vrot.lane.b32.xlu0 %v1288, 127
  %v1343 = vpop.permute.xlu0 %1342
  %1344 = vrot.lane.b32.xlu0 %v1293, 127
  %v1345 = vpop.permute.xlu0 %1344
  %1346 = vrot.lane.b32.xlu0 %v1298, 127
  %v1347 = vpop.permute.xlu0 %1346
  %1348 = vrot.lane.b32.xlu0 %v1303, 127
  %v1349 = vpop.permute.xlu0 %1348
  %1350 = vrot.lane.b32.xlu0 %v1308, 127
  %v1351 = vpop.permute.xlu0 %1350
  %1352 = vrot.lane.b32.xlu0 %v1313, 127
  %v1353 = vpop.permute.xlu0 %1352
  %1354 = vrot.lane.b32.xlu0 %v1318, 127
  %v1355 = vpop.permute.xlu0 %1354
  %1356 = vrot.lane.b32.xlu0 %v1323, 127
  %v1357 = vpop.permute.xlu0 %1356
  %v1366 = vsub.f32 %v1288, %v1343
  %v1367 = vsub.f32 %v1293, %v1345
  %v1368 = vsub.f32 %v1298, %v1347
  %v1369 = vsub.f32 %v1303, %v1349
  %v1370 = vsub.f32 %v1308, %v1351
  %v1371 = vsub.f32 %v1313, %v1353
  %v1372 = vsub.f32 %v1318, %v1355
  %v1373 = vsub.f32 %v1323, %v1357
  %v1374 = vxor.u32 %v1366, 2147483648
  %v1375 = vxor.u32 %v1367, 2147483648
  %v1376 = vxor.u32 %v1368, 2147483648
  %v1377 = vxor.u32 %v1369, 2147483648
  %v1378 = vxor.u32 %v1370, 2147483648
  %v1379 = vxor.u32 %v1371, 2147483648
  %v1380 = vxor.u32 %v1372, 2147483648
  %v1381 = vxor.u32 %v1373, 2147483648
  %v1382 = vmul.f32 %v1374, 1.442695
  %v1383 = vpow.pop %v1382
  %v1384 = vmul.f32 %v1375, 1.442695
  %v1385 = vpow.pop %v1384
  %v1386 = vmul.f32 %v1376, 1.442695
  %v1387 = vpow.pop %v1386
  %v1388 = vmul.f32 %v1377, 1.442695
  %v1389 = vpow.pop %v1388
  %v1390 = vmul.f32 %v1378, 1.442695
  %v1391 = vpow.pop %v1390
  %v1392 = vmul.f32 %v1379, 1.442695
  %v1393 = vpow.pop %v1392
  %v1394 = vmul.f32 %v1380, 1.442695
  %v1395 = vpow.pop %v1394
  %v1396 = vmul.f32 %v1381, 1.442695
  %v1397 = vpow.pop %v1396
  %v1398 = vadd.f32 %v1383, 1.0
  %v1399 = vadd.f32 %v1385, 1.0
  %v1400 = vadd.f32 %v1387, 1.0
  %v1401 = vadd.f32 %v1389, 1.0
  %v1402 = vadd.f32 %v1391, 1.0
  %v1403 = vadd.f32 %v1393, 1.0
  %v1404 = vadd.f32 %v1395, 1.0
  %v1405 = vadd.f32 %v1397, 1.0
  %v1406 = vrcp.pop %v1398
  %v1407 = vmul.f32 1.0, %v1406
  %v1408 = vrcp.pop %v1399
  %v1409 = vmul.f32 1.0, %v1408
  %v1410 = vrcp.pop %v1400
  %v1411 = vmul.f32 1.0, %v1410
  %v1412 = vrcp.pop %v1401
  %v1413 = vmul.f32 1.0, %v1412
  %v1414 = vrcp.pop %v1402
  %v1415 = vmul.f32 1.0, %v1414
  %v1416 = vrcp.pop %v1403
  %v1417 = vmul.f32 1.0, %v1416
  %v1418 = vrcp.pop %v1404
  %v1419 = vmul.f32 1.0, %v1418
  %v1420 = vrcp.pop %v1405
  %v1421 = vmul.f32 1.0, %v1420
  %v1422 = vsub.f32 1.0, %v1407
  %v1423 = vsub.f32 1.0, %v1409
  %v1424 = vsub.f32 1.0, %v1411
  %v1425 = vsub.f32 1.0, %v1413
  %v1426 = vsub.f32 1.0, %v1415
  %v1427 = vsub.f32 1.0, %v1417
  %v1428 = vsub.f32 1.0, %v1419
  %v1429 = vsub.f32 1.0, %v1421
  %1431 = vset.pattern.permute.xlu0 0
  %1432 = vperm.xlu0 %1431, %v1407
  %v1433 = vpop.permute.xlu0 %1432
  %1436 = vset.pattern.permute.xlu0 0
  %1437 = vperm.xlu0 %1436, %v1409
  %v1438 = vpop.permute.xlu0 %1437
  %1441 = vset.pattern.permute.xlu0 0
  %1442 = vperm.xlu0 %1441, %v1411
  %v1443 = vpop.permute.xlu0 %1442
  %1446 = vset.pattern.permute.xlu0 0
  %1447 = vperm.xlu0 %1446, %v1413
  %v1448 = vpop.permute.xlu0 %1447
  %1451 = vset.pattern.permute.xlu0 0
  %1452 = vperm.xlu0 %1451, %v1415
  %v1453 = vpop.permute.xlu0 %1452
  %1456 = vset.pattern.permute.xlu0 0
  %1457 = vperm.xlu0 %1456, %v1417
  %v1458 = vpop.permute.xlu0 %1457
  %1461 = vset.pattern.permute.xlu0 0
  %1462 = vperm.xlu0 %1461, %v1419
  %v1463 = vpop.permute.xlu0 %1462
  %1466 = vset.pattern.permute.xlu0 0
  %1467 = vperm.xlu0 %1466, %v1421
  %v1468 = vpop.permute.xlu0 %1467
  %v1470 = vmul.f32 %v1433, %v1326
  %v1471 = vmul.f32 %v1438, %v1327
  %v1472 = vmul.f32 %v1443, %v1328
  %v1473 = vmul.f32 %v1448, %v1329
  %v1474 = vmul.f32 %v1453, %v1330
  %v1475 = vmul.f32 %v1458, %v1331
  %v1476 = vmul.f32 %v1463, %v1332
  %v1477 = vmul.f32 %v1468, %v1333
  %1479 = vset.pattern.permute.xlu0 0
  %1480 = vperm.xlu0 %1479, %v1422
  %v1481 = vpop.permute.xlu0 %1480
  %1484 = vset.pattern.permute.xlu0 0
  %1485 = vperm.xlu0 %1484, %v1423
  %v1486 = vpop.permute.xlu0 %1485
  %1489 = vset.pattern.permute.xlu0 0
  %1490 = vperm.xlu0 %1489, %v1424
  %v1491 = vpop.permute.xlu0 %1490
  %1494 = vset.pattern.permute.xlu0 0
  %1495 = vperm.xlu0 %1494, %v1425
  %v1496 = vpop.permute.xlu0 %1495
  %1499 = vset.pattern.permute.xlu0 0
  %1500 = vperm.xlu0 %1499, %v1426
  %v1501 = vpop.permute.xlu0 %1500
  %1504 = vset.pattern.permute.xlu0 0
  %1505 = vperm.xlu0 %1504, %v1427
  %v1506 = vpop.permute.xlu0 %1505
  %1509 = vset.pattern.permute.xlu0 0
  %1510 = vperm.xlu0 %1509, %v1428
  %v1511 = vpop.permute.xlu0 %1510
  %1514 = vset.pattern.permute.xlu0 0
  %1515 = vperm.xlu0 %1514, %v1429
  %v1516 = vpop.permute.xlu0 %1515
  %v1518 = vmul.f32 %v1481, %v1326
  %v1519 = vmul.f32 %v1486, %v1327
  %v1520 = vmul.f32 %v1491, %v1328
  %v1521 = vmul.f32 %v1496, %v1329
  %v1522 = vmul.f32 %v1501, %v1330
  %v1523 = vmul.f32 %v1506, %v1331
  %v1524 = vmul.f32 %v1511, %v1332
  %v1525 = vmul.f32 %v1516, %v1333
  %1534 = vrot.lane.b32.xlu0 %v1518, 96
  %v1535 = vpop.permute.xlu0 %1534
  %1536 = vrot.lane.b32.xlu0 %v1519, 96
  %v1537 = vpop.permute.xlu0 %1536
  %1538 = vrot.lane.b32.xlu0 %v1520, 96
  %v1539 = vpop.permute.xlu0 %1538
  %1540 = vrot.lane.b32.xlu0 %v1521, 96
  %v1541 = vpop.permute.xlu0 %1540
  %1542 = vrot.lane.b32.xlu0 %v1522, 96
  %v1543 = vpop.permute.xlu0 %1542
  %1544 = vrot.lane.b32.xlu0 %v1523, 96
  %v1545 = vpop.permute.xlu0 %1544
  %1546 = vrot.lane.b32.xlu0 %v1524, 96
  %v1547 = vpop.permute.xlu0 %1546
  %1548 = vrot.lane.b32.xlu0 %v1525, 96
  %v1549 = vpop.permute.xlu0 %1548
  %v1558 = vadd.f32 %v1470, %v1535
  %v1559 = vadd.f32 %v1471, %v1537
  %v1560 = vadd.f32 %v1472, %v1539
  %v1561 = vadd.f32 %v1473, %v1541
  %v1562 = vadd.f32 %v1474, %v1543
  %v1563 = vadd.f32 %v1475, %v1545
  %v1564 = vadd.f32 %v1476, %v1547
  %v1565 = vadd.f32 %v1477, %v1549
  %v1566 = vadd.f32 %v1558, %v1326
  %v1567 = vadd.f32 %v1559, %v1327
  %v1568 = vadd.f32 %v1560, %v1328
  %v1569 = vadd.f32 %v1561, %v1329
  %v1570 = vadd.f32 %v1562, %v1330
  %v1571 = vadd.f32 %v1563, %v1331
  %v1572 = vadd.f32 %v1564, %v1332
  %v1573 = vadd.f32 %v1565, %v1333
  %v1574 = vmul.f32 %v1566, 0.5
  %v1575 = vmul.f32 %v1567, 0.5
  %v1576 = vmul.f32 %v1568, 0.5
  %v1577 = vmul.f32 %v1569, 0.5
  %v1578 = vmul.f32 %v1570, 0.5
  %v1579 = vmul.f32 %v1571, 0.5
  %v1580 = vmul.f32 %v1572, 0.5
  %v1581 = vmul.f32 %v1573, 0.5
  %1582 = vset.pattern.permute.xlu0 2
  %1583 = vperm.xlu0 %1582, %v1407
  %v1584 = vpop.permute.xlu0 %1583
  %1586 = vset.pattern.permute.xlu0 2
  %1587 = vperm.xlu0 %1586, %v1409
  %v1588 = vpop.permute.xlu0 %1587
  %1590 = vset.pattern.permute.xlu0 2
  %1591 = vperm.xlu0 %1590, %v1411
  %v1592 = vpop.permute.xlu0 %1591
  %1594 = vset.pattern.permute.xlu0 2
  %1595 = vperm.xlu0 %1594, %v1413
  %v1596 = vpop.permute.xlu0 %1595
  %1598 = vset.pattern.permute.xlu0 2
  %1599 = vperm.xlu0 %1598, %v1415
  %v1600 = vpop.permute.xlu0 %1599
  %1602 = vset.pattern.permute.xlu0 2
  %1603 = vperm.xlu0 %1602, %v1417
  %v1604 = vpop.permute.xlu0 %1603
  %1606 = vset.pattern.permute.xlu0 2
  %1607 = vperm.xlu0 %1606, %v1419
  %v1608 = vpop.permute.xlu0 %1607
  %1610 = vset.pattern.permute.xlu0 2
  %1611 = vperm.xlu0 %1610, %v1421
  %v1612 = vpop.permute.xlu0 %1611
  %v1614 = vmul.f32 %v1584, %v1326
  %v1615 = vmul.f32 %v1588, %v1327
  %v1616 = vmul.f32 %v1592, %v1328
  %v1617 = vmul.f32 %v1596, %v1329
  %v1618 = vmul.f32 %v1600, %v1330
  %v1619 = vmul.f32 %v1604, %v1331
  %v1620 = vmul.f32 %v1608, %v1332
  %v1621 = vmul.f32 %v1612, %v1333
  %1622 = vset.pattern.permute.xlu0 2
  %1623 = vperm.xlu0 %1622, %v1422
  %v1624 = vpop.permute.xlu0 %1623
  %1626 = vset.pattern.permute.xlu0 2
  %1627 = vperm.xlu0 %1626, %v1423
  %v1628 = vpop.permute.xlu0 %1627
  %1630 = vset.pattern.permute.xlu0 2
  %1631 = vperm.xlu0 %1630, %v1424
  %v1632 = vpop.permute.xlu0 %1631
  %1634 = vset.pattern.permute.xlu0 2
  %1635 = vperm.xlu0 %1634, %v1425
  %v1636 = vpop.permute.xlu0 %1635
  %1638 = vset.pattern.permute.xlu0 2
  %1639 = vperm.xlu0 %1638, %v1426
  %v1640 = vpop.permute.xlu0 %1639
  %1642 = vset.pattern.permute.xlu0 2
  %1643 = vperm.xlu0 %1642, %v1427
  %v1644 = vpop.permute.xlu0 %1643
  %1646 = vset.pattern.permute.xlu0 2
  %1647 = vperm.xlu0 %1646, %v1428
  %v1648 = vpop.permute.xlu0 %1647
  %1650 = vset.pattern.permute.xlu0 2
  %1651 = vperm.xlu0 %1650, %v1429
  %v1652 = vpop.permute.xlu0 %1651
  %v1654 = vmul.f32 %v1624, %v1326
  %v1655 = vmul.f32 %v1628, %v1327
  %v1656 = vmul.f32 %v1632, %v1328
  %v1657 = vmul.f32 %v1636, %v1329
  %v1658 = vmul.f32 %v1640, %v1330
  %v1659 = vmul.f32 %v1644, %v1331
  %v1660 = vmul.f32 %v1648, %v1332
  %v1661 = vmul.f32 %v1652, %v1333
  %1670 = vrot.lane.b32.xlu0 %v1654, 96
  %v1671 = vpop.permute.xlu0 %1670
  %1672 = vrot.lane.b32.xlu0 %v1655, 96
  %v1673 = vpop.permute.xlu0 %1672
  %1674 = vrot.lane.b32.xlu0 %v1656, 96
  %v1675 = vpop.permute.xlu0 %1674
  %1676 = vrot.lane.b32.xlu0 %v1657, 96
  %v1677 = vpop.permute.xlu0 %1676
  %1678 = vrot.lane.b32.xlu0 %v1658, 96
  %v1679 = vpop.permute.xlu0 %1678
  %1680 = vrot.lane.b32.xlu0 %v1659, 96
  %v1681 = vpop.permute.xlu0 %1680
  %1682 = vrot.lane.b32.xlu0 %v1660, 96
  %v1683 = vpop.permute.xlu0 %1682
  %1684 = vrot.lane.b32.xlu0 %v1661, 96
  %v1685 = vpop.permute.xlu0 %1684
  %v1694 = vadd.f32 %v1614, %v1671
  %v1695 = vadd.f32 %v1615, %v1673
  %v1696 = vadd.f32 %v1616, %v1675
  %v1697 = vadd.f32 %v1617, %v1677
  %v1698 = vadd.f32 %v1618, %v1679
  %v1699 = vadd.f32 %v1619, %v1681
  %v1700 = vadd.f32 %v1620, %v1683
  %v1701 = vadd.f32 %v1621, %v1685
  %1710 = vrot.lane.b32.xlu0 %v1326, 96
  %v1711 = vpop.permute.xlu0 %1710
  %1712 = vrot.lane.b32.xlu0 %v1327, 96
  %v1713 = vpop.permute.xlu0 %1712
  %1714 = vrot.lane.b32.xlu0 %v1328, 96
  %v1715 = vpop.permute.xlu0 %1714
  %1716 = vrot.lane.b32.xlu0 %v1329, 96
  %v1717 = vpop.permute.xlu0 %1716
  %1718 = vrot.lane.b32.xlu0 %v1330, 96
  %v1719 = vpop.permute.xlu0 %1718
  %1720 = vrot.lane.b32.xlu0 %v1331, 96
  %v1721 = vpop.permute.xlu0 %1720
  %1722 = vrot.lane.b32.xlu0 %v1332, 96
  %v1723 = vpop.permute.xlu0 %1722
  %1724 = vrot.lane.b32.xlu0 %v1333, 96
  %v1725 = vpop.permute.xlu0 %1724
  %v1734 = vadd.f32 %v1694, %v1711
  %v1735 = vadd.f32 %v1695, %v1713
  %v1736 = vadd.f32 %v1696, %v1715
  %v1737 = vadd.f32 %v1697, %v1717
  %v1738 = vadd.f32 %v1698, %v1719
  %v1739 = vadd.f32 %v1699, %v1721
  %v1740 = vadd.f32 %v1700, %v1723
  %v1741 = vadd.f32 %v1701, %v1725
  %v1742 = vmul.f32 %v1734, 0.5
  %v1743 = vmul.f32 %v1735, 0.5
  %v1744 = vmul.f32 %v1736, 0.5
  %v1745 = vmul.f32 %v1737, 0.5
  %v1746 = vmul.f32 %v1738, 0.5
  %v1747 = vmul.f32 %v1739, 0.5
  %v1748 = vmul.f32 %v1740, 0.5
  %v1749 = vmul.f32 %v1741, 0.5
  %1758 = vrot.lane.b32.xlu0 %v1742, 32
  %v1759 = vpop.permute.xlu0 %1758
  %1760 = vrot.lane.b32.xlu0 %v1743, 32
  %v1761 = vpop.permute.xlu0 %1760
  %1762 = vrot.lane.b32.xlu0 %v1744, 32
  %v1763 = vpop.permute.xlu0 %1762
  %1764 = vrot.lane.b32.xlu0 %v1745, 32
  %v1765 = vpop.permute.xlu0 %1764
  %1766 = vrot.lane.b32.xlu0 %v1746, 32
  %v1767 = vpop.permute.xlu0 %1766
  %1768 = vrot.lane.b32.xlu0 %v1747, 32
  %v1769 = vpop.permute.xlu0 %1768
  %1770 = vrot.lane.b32.xlu0 %v1748, 32
  %v1771 = vpop.permute.xlu0 %1770
  %1772 = vrot.lane.b32.xlu0 %v1749, 32
  %v1773 = vpop.permute.xlu0 %1772
  %vm1782 = vcmask 261120
  %v1783 = vsel %vm1782, %v1574, %v1759
  %v1784 = vsel %vm1782, %v1575, %v1761
  %v1785 = vsel %vm1782, %v1576, %v1763
  %v1786 = vsel %vm1782, %v1577, %v1765
  %v1787 = vsel %vm1782, %v1578, %v1767
  %v1788 = vsel %vm1782, %v1579, %v1769
  %v1789 = vsel %vm1782, %v1580, %v1771
  %v1790 = vsel %vm1782, %v1581, %v1773
  %1791 = vst.msk [vmem:[%s11] sm:$0xff] %vm582, %v1783
  %1792 = vst.msk [vmem:[%s11 + $0x8] sm:$0xff] %vm582, %v1784
  %1793 = vst.msk [vmem:[%s11 + $0x10] sm:$0xff] %vm582, %v1785
  %1794 = vst.msk [vmem:[%s11 + $0x18] sm:$0xff] %vm582, %v1786
  %1795 = vst.msk [vmem:[%s11 + $0x20] sm:$0xff] %vm582, %v1787
  %1796 = vst.msk [vmem:[%s11 + $0x28] sm:$0xff] %vm582, %v1788
  %1797 = vst.msk [vmem:[%s11 + $0x30] sm:$0xff] %vm582, %v1789
  %1798 = vst.msk [vmem:[%s11 + $0x38] sm:$0xff] %vm582, %v1790
  %v1799 = vlaneseq
  %v1800 = vshrl.u32 %v1799, 7
  %v1801 = vsub.s32 1, %v1800
  %v1802 = vrot.slane %v1112, %v1801
  %v1803 = vmul.f32 %v868, %v1802
  %v1804 = vmul.f32 %v871, %v1802
  %v1805 = vmul.f32 %v876, %v1802
  %v1806 = vmul.f32 %v879, %v1802
  %v1807 = vmul.f32 %v884, %v1802
  %v1808 = vmul.f32 %v887, %v1802
  %v1809 = vmul.f32 %v892, %v1802
  %v1810 = vmul.f32 %v895, %v1802
  %v1811 = vlaneseq
  %v1812 = vshrl.u32 %v1811, 7
  %v1813 = vsub.s32 1, %v1812
  %v1814 = vrot.slane %v1124, %v1813
  %v1815 = vadd.f32 %v1803, %v1814
  %v1816 = vadd.f32 %v1804, %v1814
  %v1817 = vadd.f32 %v1805, %v1814
  %v1818 = vadd.f32 %v1806, %v1814
  %v1819 = vadd.f32 %v1807, %v1814
  %v1820 = vadd.f32 %v1808, %v1814
  %v1821 = vadd.f32 %v1809, %v1814
  %v1822 = vadd.f32 %v1810, %v1814
  %v1823 = vmul.f32 %v1815, 0.5
  %v1824 = vmul.f32 %v1816, 0.5
  %v1825 = vmul.f32 %v1817, 0.5
  %v1826 = vmul.f32 %v1818, 0.5
  %v1827 = vmul.f32 %v1819, 0.5
  %v1828 = vmul.f32 %v1820, 0.5
  %v1829 = vmul.f32 %v1821, 0.5
  %v1830 = vmul.f32 %v1822, 0.5
  %v1831 = vmul.f32 %v1815, 0.70710677
  %v1832 = vmul.f32 %v1816, 0.70710677
  %v1833 = vmul.f32 %v1817, 0.70710677
  %v1834 = vmul.f32 %v1818, 0.70710677
  %v1835 = vmul.f32 %v1819, 0.70710677
  %v1836 = vmul.f32 %v1820, 0.70710677
  %v1837 = vmul.f32 %v1821, 0.70710677
  %v1838 = vmul.f32 %v1822, 0.70710677
  %v1839 = verf.f32.pop %v1831
  %v1840 = verf.f32.pop %v1832
  %v1841 = verf.f32.pop %v1833
  %v1842 = verf.f32.pop %v1834
  %v1843 = verf.f32.pop %v1835
  %v1844 = verf.f32.pop %v1836
  %v1845 = verf.f32.pop %v1837
  %v1846 = verf.f32.pop %v1838
  %v1847 = vadd.f32 %v1839, 1.0
  %v1848 = vadd.f32 %v1840, 1.0
  %v1849 = vadd.f32 %v1841, 1.0
  %v1850 = vadd.f32 %v1842, 1.0
  %v1851 = vadd.f32 %v1843, 1.0
  %v1852 = vadd.f32 %v1844, 1.0
  %v1853 = vadd.f32 %v1845, 1.0
  %v1854 = vadd.f32 %v1846, 1.0
  %v1855 = vmul.f32 %v1823, %v1847
  %v1856 = vmul.f32 %v1824, %v1848
  %v1857 = vmul.f32 %v1825, %v1849
  %v1858 = vmul.f32 %v1826, %v1850
  %v1859 = vmul.f32 %v1827, %v1851
  %v1860 = vmul.f32 %v1828, %v1852
  %v1861 = vmul.f32 %v1829, %v1853
  %v1862 = vmul.f32 %v1830, %v1854
  %v1863 = vld [vmem:[%s9] sm:$0xff]
  %v1864 = vld [vmem:[%s10] sm:$0x1]
  %v1866 = vlaneseq
  %v1867 = vshrl.u32 %v1866, 7
  %v1868 = vsub.s32 0, %v1867
  %v1869 = vrot.slane %v1864, %v1868
  %v1872 = vsel %vm898, %v1855, 0
  %v1875 = vsel %vm898, %v1856, 0
  %v1878 = vsel %vm898, %v1857, 0
  %v1881 = vsel %vm898, %v1858, 0
  %v1884 = vsel %vm898, %v1859, 0
  %v1887 = vsel %vm898, %v1860, 0
  %v1890 = vsel %vm898, %v1861, 0
  %v1893 = vsel %vm898, %v1862, 0
  %1895 = vmatprep.subr.mxu0 0.0
  %1896 = vmatpush1.msra.mxu0 %v1863
  %1897 = vmatprep.subr.mxu0 0.0
  %1898 = vmatpush1.msra.mxu0 0.0
  %1899 = vmatprep.subr.mxu0 0.0
  %1900 = vmatpush1.msra.mxu0 0.0
  %1901 = vmatprep.subr.mxu0 0.0
  %1902 = vmatpush1.msra.mxu0 0.0
  %1903 = vmatprep.subr.mxu0 0.0
  %1904 = vmatpush1.msra.mxu0 0.0
  %1905 = vmatprep.subr.mxu0 0.0
  %1906 = vmatpush1.msra.mxu0 0.0
  %1907 = vmatprep.subr.mxu0 0.0
  %1908 = vmatpush1.msra.mxu0 0.0
  %1909 = vmatprep.subr.mxu0 0.0
  %1910 = vmatpush1.msra.mxu0 0.0
  %1911 = vmatprep.subr.mxu0 0.0
  %1912 = vmatpush1.msra.mxu0 0.0
  %1913 = vmatprep.subr.mxu0 0.0
  %1914 = vmatpush1.msra.mxu0 0.0
  %1915 = vmatprep.subr.mxu0 0.0
  %1916 = vmatpush1.msra.mxu0 0.0
  %1917 = vmatprep.subr.mxu0 0.0
  %1918 = vmatpush1.msra.mxu0 0.0
  %1919 = vmatprep.subr.mxu0 0.0
  %1920 = vmatpush1.msra.mxu0 0.0
  %1921 = vmatprep.subr.mxu0 0.0
  %1922 = vmatpush1.msra.mxu0 0.0
  %1923 = vmatprep.subr.mxu0 0.0
  %1924 = vmatpush1.msra.mxu0 0.0
  %1925 = vmatprep.subr.mxu0 0.0
  %1926 = vmatpush1.msra.mxu0 0.0
  %1927 = vmatprep.subr.mxu0 0.0
  %1928 = vmatpush1.msra.mxu0 0.0
  %1929 = vmatprep.subr.mxu0 0.0
  %1930 = vmatpush1.msra.mxu0 0.0
  %1931 = vmatprep.subr.mxu0 0.0
  %1932 = vmatpush1.msra.mxu0 0.0
  %1933 = vmatprep.subr.mxu0 0.0
  %1934 = vmatpush1.msra.mxu0 0.0
  %1935 = vmatprep.subr.mxu0 0.0
  %1936 = vmatpush1.msra.mxu0 0.0
  %1937 = vmatprep.subr.mxu0 0.0
  %1938 = vmatpush1.msra.mxu0 0.0
  %1939 = vmatprep.subr.mxu0 0.0
  %1940 = vmatpush1.msra.mxu0 0.0
  %1941 = vmatprep.subr.mxu0 0.0
  %1942 = vmatpush1.msra.mxu0 0.0
  %1943 = vmatprep.subr.mxu0 0.0
  %1944 = vmatpush1.msra.mxu0 0.0
  %1945 = vmatprep.subr.mxu0 0.0
  %1946 = vmatpush1.msra.mxu0 0.0
  %1947 = vmatprep.subr.mxu0 0.0
  %1948 = vmatpush1.msra.mxu0 0.0
  %1949 = vmatprep.subr.mxu0 0.0
  %1950 = vmatpush1.msra.mxu0 0.0
  %1951 = vmatprep.subr.mxu0 0.0
  %1952 = vmatpush1.msra.mxu0 0.0
  %1953 = vmatprep.subr.mxu0 0.0
  %1954 = vmatpush1.msra.mxu0 0.0
  %1955 = vmatprep.subr.mxu0 0.0
  %1956 = vmatpush1.msra.mxu0 0.0
  %1957 = vmatprep.subr.mxu0 0.0
  %1958 = vmatpush1.msra.mxu0 0.0
  %1959 = vmatprep.mubr.f32.mxu0 0.0
  %1960 = vmatmul.mubr.f32.gmra.mrb[0].mxu0 %v1872
  %v1961 = vpop.f32.mrb[0].mxu0
  %v1962 = vadd.f32 %v1869, %v1961
  %v1963 = vpop.f32.mrb[0].mxu0
  %1964 = vmatprep.mubr.f32.mxu0 0.0
  %1965 = vmatmul.mubr.f32.gmra.mrb[0].mxu0 %v1875
  %v1966 = vpop.f32.mrb[0].mxu0
  %v1967 = vadd.f32 %v1869, %v1966
  %v1968 = vpop.f32.mrb[0].mxu0
  %1969 = vmatprep.mubr.f32.mxu0 0.0
  %1970 = vmatmul.mubr.f32.gmra.mrb[0].mxu0 %v1878
  %v1971 = vpop.f32.mrb[0].mxu0
  %v1972 = vadd.f32 %v1869, %v1971
  %v1973 = vpop.f32.mrb[0].mxu0
  %1974 = vmatprep.mubr.f32.mxu0 0.0
  %1975 = vmatmul.mubr.f32.gmra.mrb[0].mxu0 %v1881
  %v1976 = vpop.f32.mrb[0].mxu0
  %v1977 = vadd.f32 %v1869, %v1976
  %v1978 = vpop.f32.mrb[0].mxu0
  %1979 = vmatprep.mubr.f32.mxu0 0.0
  %1980 = vmatmul.mubr.f32.gmra.mrb[0].mxu0 %v1884
  %v1981 = vpop.f32.mrb[0].mxu0
  %v1982 = vadd.f32 %v1869, %v1981
  %v1983 = vpop.f32.mrb[0].mxu0
  %1984 = vmatprep.mubr.f32.mxu0 0.0
  %1985 = vmatmul.mubr.f32.gmra.mrb[0].mxu0 %v1887
  %v1986 = vpop.f32.mrb[0].mxu0
  %v1987 = vadd.f32 %v1869, %v1986
  %v1988 = vpop.f32.mrb[0].mxu0
  %1989 = vmatprep.mubr.f32.mxu0 0.0
  %1990 = vmatmul.mubr.f32.gmra.mrb[0].mxu0 %v1890
  %v1991 = vpop.f32.mrb[0].mxu0
  %v1992 = vadd.f32 %v1869, %v1991
  %v1993 = vpop.f32.mrb[0].mxu0
  %1994 = vmatprep.mubr.f32.mxu0 0.0
  %1995 = vmatmul.mubr.f32.gmra.mrb[0].mxu0 %v1893
  %v1996 = vpop.f32.mrb[0].mxu0
  %v1997 = vadd.f32 %v1869, %v1996
  %v1998 = vpop.f32.mrb[0].mxu0
  %1999 = vdwg.mxu0
  %v2000 = vld [vmem:[%s1 + $0x40] sm:$0xff]
  %v2001 = vld [vmem:[%s1 + $0x48] sm:$0xff]
  %v2002 = vld [vmem:[%s1 + $0x50] sm:$0xff]
  %v2003 = vld [vmem:[%s1 + $0x58] sm:$0xff]
  %v2004 = vld [vmem:[%s1 + $0x60] sm:$0xff]
  %v2005 = vld [vmem:[%s1 + $0x68] sm:$0xff]
  %v2006 = vld [vmem:[%s1 + $0x70] sm:$0xff]
  %v2007 = vld [vmem:[%s1 + $0x78] sm:$0xff]
  %2016 = vrot.lane.b32.xlu0 %v1962, 127
  %v2017 = vpop.permute.xlu0 %2016
  %2018 = vrot.lane.b32.xlu0 %v1967, 127
  %v2019 = vpop.permute.xlu0 %2018
  %2020 = vrot.lane.b32.xlu0 %v1972, 127
  %v2021 = vpop.permute.xlu0 %2020
  %2022 = vrot.lane.b32.xlu0 %v1977, 127
  %v2023 = vpop.permute.xlu0 %2022
  %2024 = vrot.lane.b32.xlu0 %v1982, 127
  %v2025 = vpop.permute.xlu0 %2024
  %2026 = vrot.lane.b32.xlu0 %v1987, 127
  %v2027 = vpop.permute.xlu0 %2026
  %2028 = vrot.lane.b32.xlu0 %v1992, 127
  %v2029 = vpop.permute.xlu0 %2028
  %2030 = vrot.lane.b32.xlu0 %v1997, 127
  %v2031 = vpop.permute.xlu0 %2030
  %v2040 = vsub.f32 %v1962, %v2017
  %v2041 = vsub.f32 %v1967, %v2019
  %v2042 = vsub.f32 %v1972, %v2021
  %v2043 = vsub.f32 %v1977, %v2023
  %v2044 = vsub.f32 %v1982, %v2025
  %v2045 = vsub.f32 %v1987, %v2027
  %v2046 = vsub.f32 %v1992, %v2029
  %v2047 = vsub.f32 %v1997, %v2031
  %v2048 = vxor.u32 %v2040, 2147483648
  %v2049 = vxor.u32 %v2041, 2147483648
  %v2050 = vxor.u32 %v2042, 2147483648
  %v2051 = vxor.u32 %v2043, 2147483648
  %v2052 = vxor.u32 %v2044, 2147483648
  %v2053 = vxor.u32 %v2045, 2147483648
  %v2054 = vxor.u32 %v2046, 2147483648
  %v2055 = vxor.u32 %v2047, 2147483648
  %v2056 = vmul.f32 %v2048, 1.442695
  %v2057 = vpow.pop %v2056
  %v2058 = vmul.f32 %v2049, 1.442695
  %v2059 = vpow.pop %v2058
  %v2060 = vmul.f32 %v2050, 1.442695
  %v2061 = vpow.pop %v2060
  %v2062 = vmul.f32 %v2051, 1.442695
  %v2063 = vpow.pop %v2062
  %v2064 = vmul.f32 %v2052, 1.442695
  %v2065 = vpow.pop %v2064
  %v2066 = vmul.f32 %v2053, 1.442695
  %v2067 = vpow.pop %v2066
  %v2068 = vmul.f32 %v2054, 1.442695
  %v2069 = vpow.pop %v2068
  %v2070 = vmul.f32 %v2055, 1.442695
  %v2071 = vpow.pop %v2070
  %v2072 = vadd.f32 %v2057, 1.0
  %v2073 = vadd.f32 %v2059, 1.0
  %v2074 = vadd.f32 %v2061, 1.0
  %v2075 = vadd.f32 %v2063, 1.0
  %v2076 = vadd.f32 %v2065, 1.0
  %v2077 = vadd.f32 %v2067, 1.0
  %v2078 = vadd.f32 %v2069, 1.0
  %v2079 = vadd.f32 %v2071, 1.0
  %v2080 = vrcp.pop %v2072
  %v2081 = vmul.f32 1.0, %v2080
  %v2082 = vrcp.pop %v2073
  %v2083 = vmul.f32 1.0, %v2082
  %v2084 = vrcp.pop %v2074
  %v2085 = vmul.f32 1.0, %v2084
  %v2086 = vrcp.pop %v2075
  %v2087 = vmul.f32 1.0, %v2086
  %v2088 = vrcp.pop %v2076
  %v2089 = vmul.f32 1.0, %v2088
  %v2090 = vrcp.pop %v2077
  %v2091 = vmul.f32 1.0, %v2090
  %v2092 = vrcp.pop %v2078
  %v2093 = vmul.f32 1.0, %v2092
  %v2094 = vrcp.pop %v2079
  %v2095 = vmul.f32 1.0, %v2094
  %v2096 = vsub.f32 1.0, %v2081
  %v2097 = vsub.f32 1.0, %v2083
  %v2098 = vsub.f32 1.0, %v2085
  %v2099 = vsub.f32 1.0, %v2087
  %v2100 = vsub.f32 1.0, %v2089
  %v2101 = vsub.f32 1.0, %v2091
  %v2102 = vsub.f32 1.0, %v2093
  %v2103 = vsub.f32 1.0, %v2095
  %2105 = vset.pattern.permute.xlu0 0
  %2106 = vperm.xlu0 %2105, %v2081
  %v2107 = vpop.permute.xlu0 %2106
  %2110 = vset.pattern.permute.xlu0 0
  %2111 = vperm.xlu0 %2110, %v2083
  %v2112 = vpop.permute.xlu0 %2111
  %2115 = vset.pattern.permute.xlu0 0
  %2116 = vperm.xlu0 %2115, %v2085
  %v2117 = vpop.permute.xlu0 %2116
  %2120 = vset.pattern.permute.xlu0 0
  %2121 = vperm.xlu0 %2120, %v2087
  %v2122 = vpop.permute.xlu0 %2121
  %2125 = vset.pattern.permute.xlu0 0
  %2126 = vperm.xlu0 %2125, %v2089
  %v2127 = vpop.permute.xlu0 %2126
  %2130 = vset.pattern.permute.xlu0 0
  %2131 = vperm.xlu0 %2130, %v2091
  %v2132 = vpop.permute.xlu0 %2131
  %2135 = vset.pattern.permute.xlu0 0
  %2136 = vperm.xlu0 %2135, %v2093
  %v2137 = vpop.permute.xlu0 %2136
  %2140 = vset.pattern.permute.xlu0 0
  %2141 = vperm.xlu0 %2140, %v2095
  %v2142 = vpop.permute.xlu0 %2141
  %v2144 = vmul.f32 %v2107, %v2000
  %v2145 = vmul.f32 %v2112, %v2001
  %v2146 = vmul.f32 %v2117, %v2002
  %v2147 = vmul.f32 %v2122, %v2003
  %v2148 = vmul.f32 %v2127, %v2004
  %v2149 = vmul.f32 %v2132, %v2005
  %v2150 = vmul.f32 %v2137, %v2006
  %v2151 = vmul.f32 %v2142, %v2007
  %2153 = vset.pattern.permute.xlu0 0
  %2154 = vperm.xlu0 %2153, %v2096
  %v2155 = vpop.permute.xlu0 %2154
  %2158 = vset.pattern.permute.xlu0 0
  %2159 = vperm.xlu0 %2158, %v2097
  %v2160 = vpop.permute.xlu0 %2159
  %2163 = vset.pattern.permute.xlu0 0
  %2164 = vperm.xlu0 %2163, %v2098
  %v2165 = vpop.permute.xlu0 %2164
  %2168 = vset.pattern.permute.xlu0 0
  %2169 = vperm.xlu0 %2168, %v2099
  %v2170 = vpop.permute.xlu0 %2169
  %2173 = vset.pattern.permute.xlu0 0
  %2174 = vperm.xlu0 %2173, %v2100
  %v2175 = vpop.permute.xlu0 %2174
  %2178 = vset.pattern.permute.xlu0 0
  %2179 = vperm.xlu0 %2178, %v2101
  %v2180 = vpop.permute.xlu0 %2179
  %2183 = vset.pattern.permute.xlu0 0
  %2184 = vperm.xlu0 %2183, %v2102
  %v2185 = vpop.permute.xlu0 %2184
  %2188 = vset.pattern.permute.xlu0 0
  %2189 = vperm.xlu0 %2188, %v2103
  %v2190 = vpop.permute.xlu0 %2189
  %v2192 = vmul.f32 %v2155, %v2000
  %v2193 = vmul.f32 %v2160, %v2001
  %v2194 = vmul.f32 %v2165, %v2002
  %v2195 = vmul.f32 %v2170, %v2003
  %v2196 = vmul.f32 %v2175, %v2004
  %v2197 = vmul.f32 %v2180, %v2005
  %v2198 = vmul.f32 %v2185, %v2006
  %v2199 = vmul.f32 %v2190, %v2007
  %2208 = vrot.lane.b32.xlu0 %v2192, 96
  %v2209 = vpop.permute.xlu0 %2208
  %2210 = vrot.lane.b32.xlu0 %v2193, 96
  %v2211 = vpop.permute.xlu0 %2210
  %2212 = vrot.lane.b32.xlu0 %v2194, 96
  %v2213 = vpop.permute.xlu0 %2212
  %2214 = vrot.lane.b32.xlu0 %v2195, 96
  %v2215 = vpop.permute.xlu0 %2214
  %2216 = vrot.lane.b32.xlu0 %v2196, 96
  %v2217 = vpop.permute.xlu0 %2216
  %2218 = vrot.lane.b32.xlu0 %v2197, 96
  %v2219 = vpop.permute.xlu0 %2218
  %2220 = vrot.lane.b32.xlu0 %v2198, 96
  %v2221 = vpop.permute.xlu0 %2220
  %2222 = vrot.lane.b32.xlu0 %v2199, 96
  %v2223 = vpop.permute.xlu0 %2222
  %v2232 = vadd.f32 %v2144, %v2209
  %v2233 = vadd.f32 %v2145, %v2211
  %v2234 = vadd.f32 %v2146, %v2213
  %v2235 = vadd.f32 %v2147, %v2215
  %v2236 = vadd.f32 %v2148, %v2217
  %v2237 = vadd.f32 %v2149, %v2219
  %v2238 = vadd.f32 %v2150, %v2221
  %v2239 = vadd.f32 %v2151, %v2223
  %v2240 = vadd.f32 %v2232, %v2000
  %v2241 = vadd.f32 %v2233, %v2001
  %v2242 = vadd.f32 %v2234, %v2002
  %v2243 = vadd.f32 %v2235, %v2003
  %v2244 = vadd.f32 %v2236, %v2004
  %v2245 = vadd.f32 %v2237, %v2005
  %v2246 = vadd.f32 %v2238, %v2006
  %v2247 = vadd.f32 %v2239, %v2007
  %v2248 = vmul.f32 %v2240, 0.5
  %v2249 = vmul.f32 %v2241, 0.5
  %v2250 = vmul.f32 %v2242, 0.5
  %v2251 = vmul.f32 %v2243, 0.5
  %v2252 = vmul.f32 %v2244, 0.5
  %v2253 = vmul.f32 %v2245, 0.5
  %v2254 = vmul.f32 %v2246, 0.5
  %v2255 = vmul.f32 %v2247, 0.5
  %2256 = vset.pattern.permute.xlu0 2
  %2257 = vperm.xlu0 %2256, %v2081
  %v2258 = vpop.permute.xlu0 %2257
  %2260 = vset.pattern.permute.xlu0 2
  %2261 = vperm.xlu0 %2260, %v2083
  %v2262 = vpop.permute.xlu0 %2261
  %2264 = vset.pattern.permute.xlu0 2
  %2265 = vperm.xlu0 %2264, %v2085
  %v2266 = vpop.permute.xlu0 %2265
  %2268 = vset.pattern.permute.xlu0 2
  %2269 = vperm.xlu0 %2268, %v2087
  %v2270 = vpop.permute.xlu0 %2269
  %2272 = vset.pattern.permute.xlu0 2
  %2273 = vperm.xlu0 %2272, %v2089
  %v2274 = vpop.permute.xlu0 %2273
  %2276 = vset.pattern.permute.xlu0 2
  %2277 = vperm.xlu0 %2276, %v2091
  %v2278 = vpop.permute.xlu0 %2277
  %2280 = vset.pattern.permute.xlu0 2
  %2281 = vperm.xlu0 %2280, %v2093
  %v2282 = vpop.permute.xlu0 %2281
  %2284 = vset.pattern.permute.xlu0 2
  %2285 = vperm.xlu0 %2284, %v2095
  %v2286 = vpop.permute.xlu0 %2285
  %v2288 = vmul.f32 %v2258, %v2000
  %v2289 = vmul.f32 %v2262, %v2001
  %v2290 = vmul.f32 %v2266, %v2002
  %v2291 = vmul.f32 %v2270, %v2003
  %v2292 = vmul.f32 %v2274, %v2004
  %v2293 = vmul.f32 %v2278, %v2005
  %v2294 = vmul.f32 %v2282, %v2006
  %v2295 = vmul.f32 %v2286, %v2007
  %2296 = vset.pattern.permute.xlu0 2
  %2297 = vperm.xlu0 %2296, %v2096
  %v2298 = vpop.permute.xlu0 %2297
  %2300 = vset.pattern.permute.xlu0 2
  %2301 = vperm.xlu0 %2300, %v2097
  %v2302 = vpop.permute.xlu0 %2301
  %2304 = vset.pattern.permute.xlu0 2
  %2305 = vperm.xlu0 %2304, %v2098
  %v2306 = vpop.permute.xlu0 %2305
  %2308 = vset.pattern.permute.xlu0 2
  %2309 = vperm.xlu0 %2308, %v2099
  %v2310 = vpop.permute.xlu0 %2309
  %2312 = vset.pattern.permute.xlu0 2
  %2313 = vperm.xlu0 %2312, %v2100
  %v2314 = vpop.permute.xlu0 %2313
  %2316 = vset.pattern.permute.xlu0 2
  %2317 = vperm.xlu0 %2316, %v2101
  %v2318 = vpop.permute.xlu0 %2317
  %2320 = vset.pattern.permute.xlu0 2
  %2321 = vperm.xlu0 %2320, %v2102
  %v2322 = vpop.permute.xlu0 %2321
  %2324 = vset.pattern.permute.xlu0 2
  %2325 = vperm.xlu0 %2324, %v2103
  %v2326 = vpop.permute.xlu0 %2325
  %v2328 = vmul.f32 %v2298, %v2000
  %v2329 = vmul.f32 %v2302, %v2001
  %v2330 = vmul.f32 %v2306, %v2002
  %v2331 = vmul.f32 %v2310, %v2003
  %v2332 = vmul.f32 %v2314, %v2004
  %v2333 = vmul.f32 %v2318, %v2005
  %v2334 = vmul.f32 %v2322, %v2006
  %v2335 = vmul.f32 %v2326, %v2007
  %2344 = vrot.lane.b32.xlu0 %v2328, 96
  %v2345 = vpop.permute.xlu0 %2344
  %2346 = vrot.lane.b32.xlu0 %v2329, 96
  %v2347 = vpop.permute.xlu0 %2346
  %2348 = vrot.lane.b32.xlu0 %v2330, 96
  %v2349 = vpop.permute.xlu0 %2348
  %2350 = vrot.lane.b32.xlu0 %v2331, 96
  %v2351 = vpop.permute.xlu0 %2350
  %2352 = vrot.lane.b32.xlu0 %v2332, 96
  %v2353 = vpop.permute.xlu0 %2352
  %2354 = vrot.lane.b32.xlu0 %v2333, 96
  %v2355 = vpop.permute.xlu0 %2354
  %2356 = vrot.lane.b32.xlu0 %v2334, 96
  %v2357 = vpop.permute.xlu0 %2356
  %2358 = vrot.lane.b32.xlu0 %v2335, 96
  %v2359 = vpop.permute.xlu0 %2358
  %v2368 = vadd.f32 %v2288, %v2345
  %v2369 = vadd.f32 %v2289, %v2347
  %v2370 = vadd.f32 %v2290, %v2349
  %v2371 = vadd.f32 %v2291, %v2351
  %v2372 = vadd.f32 %v2292, %v2353
  %v2373 = vadd.f32 %v2293, %v2355
  %v2374 = vadd.f32 %v2294, %v2357
  %v2375 = vadd.f32 %v2295, %v2359
  %2384 = vrot.lane.b32.xlu0 %v2000, 96
  %v2385 = vpop.permute.xlu0 %2384
  %2386 = vrot.lane.b32.xlu0 %v2001, 96
  %v2387 = vpop.permute.xlu0 %2386
  %2388 = vrot.lane.b32.xlu0 %v2002, 96
  %v2389 = vpop.permute.xlu0 %2388
  %2390 = vrot.lane.b32.xlu0 %v2003, 96
  %v2391 = vpop.permute.xlu0 %2390
  %2392 = vrot.lane.b32.xlu0 %v2004, 96
  %v2393 = vpop.permute.xlu0 %2392
  %2394 = vrot.lane.b32.xlu0 %v2005, 96
  %v2395 = vpop.permute.xlu0 %2394
  %2396 = vrot.lane.b32.xlu0 %v2006, 96
  %v2397 = vpop.permute.xlu0 %2396
  %2398 = vrot.lane.b32.xlu0 %v2007, 96
  %v2399 = vpop.permute.xlu0 %2398
  %v2408 = vadd.f32 %v2368, %v2385
  %v2409 = vadd.f32 %v2369, %v2387
  %v2410 = vadd.f32 %v2370, %v2389
  %v2411 = vadd.f32 %v2371, %v2391
  %v2412 = vadd.f32 %v2372, %v2393
  %v2413 = vadd.f32 %v2373, %v2395
  %v2414 = vadd.f32 %v2374, %v2397
  %v2415 = vadd.f32 %v2375, %v2399
  %v2416 = vmul.f32 %v2408, 0.5
  %v2417 = vmul.f32 %v2409, 0.5
  %v2418 = vmul.f32 %v2410, 0.5
  %v2419 = vmul.f32 %v2411, 0.5
  %v2420 = vmul.f32 %v2412, 0.5
  %v2421 = vmul.f32 %v2413, 0.5
  %v2422 = vmul.f32 %v2414, 0.5
  %v2423 = vmul.f32 %v2415, 0.5
  %2432 = vrot.lane.b32.xlu0 %v2416, 32
  %v2433 = vpop.permute.xlu0 %2432
  %2434 = vrot.lane.b32.xlu0 %v2417, 32
  %v2435 = vpop.permute.xlu0 %2434
  %2436 = vrot.lane.b32.xlu0 %v2418, 32
  %v2437 = vpop.permute.xlu0 %2436
  %2438 = vrot.lane.b32.xlu0 %v2419, 32
  %v2439 = vpop.permute.xlu0 %2438
  %2440 = vrot.lane.b32.xlu0 %v2420, 32
  %v2441 = vpop.permute.xlu0 %2440
  %2442 = vrot.lane.b32.xlu0 %v2421, 32
  %v2443 = vpop.permute.xlu0 %2442
  %2444 = vrot.lane.b32.xlu0 %v2422, 32
  %v2445 = vpop.permute.xlu0 %2444
  %2446 = vrot.lane.b32.xlu0 %v2423, 32
  %v2447 = vpop.permute.xlu0 %2446
  %v2456 = vsel %vm1782, %v2248, %v2433
  %v2457 = vsel %vm1782, %v2249, %v2435
  %v2458 = vsel %vm1782, %v2250, %v2437
  %v2459 = vsel %vm1782, %v2251, %v2439
  %v2460 = vsel %vm1782, %v2252, %v2441
  %v2461 = vsel %vm1782, %v2253, %v2443
  %v2462 = vsel %vm1782, %v2254, %v2445
  %v2463 = vsel %vm1782, %v2255, %v2447
  %2464 = vst.msk [vmem:[%s11 + $0x40] sm:$0xff] %vm582, %v2456
  %2465 = vst.msk [vmem:[%s11 + $0x48] sm:$0xff] %vm582, %v2457
  %2466 = vst.msk [vmem:[%s11 + $0x50] sm:$0xff] %vm582, %v2458
  %2467 = vst.msk [vmem:[%s11 + $0x58] sm:$0xff] %vm582, %v2459
  %2468 = vst.msk [vmem:[%s11 + $0x60] sm:$0xff] %vm582, %v2460
  %2469 = vst.msk [vmem:[%s11 + $0x68] sm:$0xff] %vm582, %v2461
  %2470 = vst.msk [vmem:[%s11 + $0x70] sm:$0xff] %vm582, %v2462
  %2471 = vst.msk [vmem:[%s11 + $0x78] sm:$0xff] %vm582, %v2463
  // Predicated region
  $region46: #{tpu_custom_call.1} parent=0 // pred_check
    _
  $region47: #{tpu_custom_call.1} parent=0 // pred_check_branch
    %2473 = sbr.rel (0) target = $region49
  $region48: #{tpu_custom_call.1} parent=0 // pred_region
    _
  $region49: #{tpu_custom_call.1} parent=0 // pred_fallthru
    _
  // Predicated region
  $region50: #{tpu_custom_call.1} parent=0 // pred_check
    _
  $region51: #{tpu_custom_call.1} parent=0 // pred_check_branch
    %2475 = sbr.rel (0) target = $region53
  $region52: #{tpu_custom_call.1} parent=0 // pred_region
    _
  $region53: #{tpu_custom_call.1} parent=0 // pred_fallthru
    _

</llo_original>
